<compile_context>
chip_gen: v7x
topology: tpu7x:2x2x1
jax: 0.10.0
libtpu: 0.0.40
codegen_flags: <defaults>
</compile_context>

<pallas_src>
import math
from functools import partial

import jax
import jax.numpy as jnp
from jax.experimental import pallas as pl
from jax.experimental.pallas import tpu as pltpu


def mha_kernel(xq_ref, xkv_ref, wq_ref, bq_ref, wkv_ref, bkv_ref, wo_ref, bo_ref,
               o_ref, concat_ref, *, h, d_k, d_v, masking, compute_dtype):
    cdt = compute_dtype
    xq = xq_ref[0]                         # (TQ, d_model), compute dtype
    xkv = xkv_ref[0]                       # (S,  d_model), compute dtype
    tq = xq.shape[0]
    s = xkv.shape[0]
    scale = 1.0 / math.sqrt(d_k)

    # ---- fused, lane-dense projections (one MXU pass each, f32 accumulation) ----
    q_all = jnp.dot(xq, wq_ref[...], preferred_element_type=jnp.float32) + bq_ref[...]
    kv_all = jnp.dot(xkv, wkv_ref[...], preferred_element_type=jnp.float32) + bkv_ref[...]
    k_all = kv_all[:, : h * d_k]           # (S, h*d_k)  f32
    v_all = kv_all[:, h * d_k:]            # (S, h*d_v)  f32

    # ---- causal mask: built once, reused by every head ----
    if masking:
        q0 = pl.program_id(1) * tq
        row = q0 + jax.lax.broadcasted_iota(jnp.int32, (tq, s), 0)
        col = jax.lax.broadcasted_iota(jnp.int32, (tq, s), 1)
        neg_bias = jnp.where(col > row, -jnp.inf, 0.0).astype(jnp.float32)

    # ---- per-head attention (h is small & static) ----
    for i in range(h):
        q = q_all[:, i * d_k:(i + 1) * d_k].astype(cdt)
        k = k_all[:, i * d_k:(i + 1) * d_k].astype(cdt)
        v = v_all[:, i * d_v:(i + 1) * d_v].astype(cdt)

        # Q K^T via dot_general (contract last dims; no explicit transpose).
        scores = jax.lax.dot_general(
            q, k, (((1,), (1,)), ((), ())),
            preferred_element_type=jnp.float32) * scale          # (TQ, S) f32
        if masking:
            scores = scores + neg_bias

        m = jnp.max(scores, axis=-1, keepdims=True)
        e = jnp.exp(scores - m)
        denom = jnp.sum(e, axis=-1, keepdims=True)
        attn = e * pl.reciprocal(denom, approx=True)              # EUP vrcp

        # Head result lands directly in its slot of the concat slab (no lane concat).
        concat_ref[:, i * d_v:(i + 1) * d_v] = jnp.dot(
            attn.astype(cdt), v, preferred_element_type=jnp.float32)

    # ---- output projection ----
    out = jnp.dot(concat_ref[...].astype(cdt), wo_ref[...],
                  preferred_element_type=jnp.float32) + bo_ref[...]
    o_ref[0] = out.astype(o_ref.dtype)


def multi_head_attention(x, params, *, masking=False, block_q=256,
                         compute_dtype=jnp.bfloat16):
    """x: (B, S, d_model) float32. params: stacked per-head weights (see init_params)."""
    B, S, d_model = x.shape
    wq_s, bq_s = params["wq"], params["bq"]        # (h, d_model, d_k), (h, 1, d_k)
    wk_s, bk_s = params["wk"], params["bk"]
    wv_s, bv_s = params["wv"], params["bv"]        # (h, d_model, d_v), (h, 1, d_v)
    wo, bo = params["wo"], params["bo"]            # (h*d_v, d_model), (1, d_model)
    h, _, d_k = wq_s.shape
    d_v = wv_s.shape[-1]

    # Fuse per-head weights into wide, lane-dense operands.
    # Head i occupies columns [i*d : (i+1)*d] of the fused projection.
    wq = wq_s.transpose(1, 0, 2).reshape(d_model, h * d_k)
    bq = bq_s.transpose(1, 0, 2).reshape(1, h * d_k)
    wk = wk_s.transpose(1, 0, 2).reshape(d_model, h * d_k)
    bk = bk_s.transpose(1, 0, 2).reshape(1, h * d_k)
    wv = wv_s.transpose(1, 0, 2).reshape(d_model, h * d_v)
    bv = bv_s.transpose(1, 0, 2).reshape(1, h * d_v)
    wkv = jnp.concatenate([wk, wv], axis=1)        # (d_model, h*(d_k+d_v))
    bkv = jnp.concatenate([bk, bv], axis=1)        # (1, h*(d_k+d_v))

    # Matmul operands in compute dtype (bf16 on v6e/v7x); biases & accumulation f32.
    cdt = compute_dtype
    x_c = x.astype(cdt)
    wq_c, wkv_c, wo_c = wq.astype(cdt), wkv.astype(cdt), wo.astype(cdt)
    bq_f = bq.astype(jnp.float32)
    bkv_f = bkv.astype(jnp.float32)
    bo_f = bo.astype(jnp.float32)

    # Query-tile grid: (B, S // TQ), both parallel (>=2 programs feeds both v7x cores).
    tq = block_q if (S % block_q == 0) else S      # small-S fallback: single query tile
    grid = (B, S // tq)

    full2d = lambda a: pl.BlockSpec(a.shape, lambda b, qi: (0, 0))

    kernel = partial(mha_kernel, h=h, d_k=d_k, d_v=d_v,
                     masking=masking, compute_dtype=cdt)
    return pl.pallas_call(
        kernel,
        out_shape=jax.ShapeDtypeStruct((B, S, d_model), x.dtype),
        grid_spec=pltpu.PrefetchScalarGridSpec(
            num_scalar_prefetch=0,
            grid=grid,
            in_specs=[
                pl.BlockSpec((1, tq, d_model), lambda b, qi: (b, qi, 0)),  # x (query rows)
                pl.BlockSpec((1, S, d_model), lambda b, qi: (b, 0, 0)),    # x (keys/values)
                full2d(wq_c), full2d(bq_f),
                full2d(wkv_c), full2d(bkv_f),
                full2d(wo_c), full2d(bo_f),
            ],
            out_specs=pl.BlockSpec((1, tq, d_model), lambda b, qi: (b, qi, 0)),
            scratch_shapes=[pltpu.VMEM((tq, h * d_v), jnp.float32)],       # concat slab
        ),
        compiler_params=pltpu.CompilerParams(
            dimension_semantics=("parallel", "parallel"),
            vmem_limit_bytes=32 * 1024 * 1024,
        ),
    )(x_c, x_c, wq_c, bq_f, wkv_c, bkv_f, wo_c, bo_f)


def init_params(key, d_model, h, d_k, d_v):
    """Deterministic synthetic init (PyTorch-Linear-style uniform ranges)."""
    ks = jax.random.split(key, 8)
    u = lambda k, shape, fan_in: jax.random.uniform(
        k, shape, jnp.float32, -1.0 / math.sqrt(fan_in), 1.0 / math.sqrt(fan_in))
    return {
        "wq": u(ks[0], (h, d_model, d_k), d_model),
        "bq": u(ks[1], (h, 1, d_k), d_model),
        "wk": u(ks[2], (h, d_model, d_k), d_model),
        "bk": u(ks[3], (h, 1, d_k), d_model),
        "wv": u(ks[4], (h, d_model, d_v), d_model),
        "bv": u(ks[5], (h, 1, d_v), d_model),
        "wo": u(ks[6], (h * d_v, d_model), h * d_v),
        "bo": u(ks[7], (1, d_model), h * d_v),
    }


def reference_mha(x, params, *, masking=False):
    """Pure-JAX reference mirroring the PyTorch module (per-head, f32)."""
    wq, bq, wk, bk = params["wq"], params["bq"], params["wk"], params["bk"]
    wv, bv, wo, bo = params["wv"], params["bv"], params["wo"], params["bo"]
    h, _, d_k = wq.shape
    heads = []
    for i in range(h):
        q = x @ wq[i] + bq[i]
        k = x @ wk[i] + bk[i]
        v = x @ wv[i] + bv[i]
        s = jnp.einsum("bqd,bkd->bqk", q, k) / math.sqrt(d_k)
        if masking:
            S = x.shape[1]
            mask = jnp.triu(jnp.ones((S, S), bool), 1)
            s = jnp.where(mask, -jnp.inf, s)
        a = jax.nn.softmax(s, axis=-1)
        heads.append(jnp.einsum("bqk,bkd->bqd", a, v))
    concat = jnp.concatenate(heads, axis=2)
    return concat @ wo + bo


if __name__ == "__main__":
    # Small shapes consistent with the module's forward: (B, S, d_model)
    B, S = 2, 8
    d_model, h, d_k, d_v = 32, 4, 8, 8

    key = jax.random.PRNGKey(0)
    kx, kp = jax.random.split(key)
    x = jax.random.normal(kx, (B, S, d_model), jnp.float32)
    params = init_params(kp, d_model, h, d_k, d_v)

    # f32 compute path (semantics check vs pure-JAX reference; approx recip in softmax).
    for mask_flag in (False, True):
        out = jax.block_until_ready(
            multi_head_attention(x, params, masking=mask_flag,
                                 compute_dtype=jnp.float32))
        ref = reference_mha(x, params, masking=mask_flag)
        assert out.shape == (B, S, d_model)
        err = jnp.max(jnp.abs(out - ref))
        assert jnp.allclose(out, ref, atol=1e-2, rtol=1e-2), \
            f"f32 mismatch (masking={mask_flag}): max|diff|={err}"

    # bf16 matmul-operand path (the optimized config on v6e/v7x), looser tolerance.
    out_bf16 = jax.block_until_ready(
        multi_head_attention(x, params, masking=False, compute_dtype=jnp.bfloat16))
    ref = reference_mha(x, params, masking=False)
    err = jnp.max(jnp.abs(out_bf16 - ref))
    assert jnp.allclose(out_bf16, ref, atol=5e-2, rtol=5e-2), \
        f"bf16 mismatch: max|diff|={err}"

    print("KERNEL_OK")
</pallas_src>

<mosaic_0001>
module attributes {stable_mosaic.version = 11 : i64} {
  func.func @mha_kernel(%arg0: i32, %arg1: i32, %arg2: memref<1x8x32xf32, #tpu.memory_space<vmem>>, %arg3: memref<1x8x32xf32, #tpu.memory_space<vmem>>, %arg4: memref<32x32xf32, #tpu.memory_space<vmem>>, %arg5: memref<1x32xf32, #tpu.memory_space<vmem>>, %arg6: memref<32x64xf32, #tpu.memory_space<vmem>>, %arg7: memref<1x64xf32, #tpu.memory_space<vmem>>, %arg8: memref<32x32xf32, #tpu.memory_space<vmem>>, %arg9: memref<1x32xf32, #tpu.memory_space<vmem>>, %arg10: memref<1x8x32xf32, #tpu.memory_space<vmem>>, %arg11: memref<8x32xf32, #tpu.memory_space<vmem>>) attributes {dimension_semantics = [#tpu.dimension_semantics<parallel>, #tpu.dimension_semantics<parallel>], iteration_bounds = array<i64: 2, 1>, scalar_prefetch = 0 : i64, scratch_operands = 1 : i64, tpu.core_type = #tpu.core_type<tc>, window_params = [{transform_indices = @transform_0, window_bounds = array<i64: 1, 8, 32>}, {transform_indices = @transform_1, window_bounds = array<i64: 1, 8, 32>}, {pipeline_mode = #tpu.pipeline_mode<synchronous>, transform_indices = @transform_2, window_bounds = array<i64: 32, 32>}, {pipeline_mode = #tpu.pipeline_mode<synchronous>, transform_indices = @transform_3, window_bounds = array<i64: 1, 32>}, {pipeline_mode = #tpu.pipeline_mode<synchronous>, transform_indices = @transform_4, window_bounds = array<i64: 32, 64>}, {pipeline_mode = #tpu.pipeline_mode<synchronous>, transform_indices = @transform_5, window_bounds = array<i64: 1, 64>}, {pipeline_mode = #tpu.pipeline_mode<synchronous>, transform_indices = @transform_6, window_bounds = array<i64: 32, 32>}, {pipeline_mode = #tpu.pipeline_mode<synchronous>, transform_indices = @transform_7, window_bounds = array<i64: 1, 32>}, {transform_indices = @transform_8, window_bounds = array<i64: 1, 8, 32>}]} {
    %c0 = arith.constant 0 : index
    %c0_0 = arith.constant 0 : index
    %c0_1 = arith.constant 0 : index
    %0 = vector.load %arg2[%c0, %c0_0, %c0_1] : memref<1x8x32xf32, #tpu.memory_space<vmem>>, vector<1x8x32xf32>
    %1 = vector.shape_cast %0 : vector<1x8x32xf32> to vector<8x32xf32>
    %c0_2 = arith.constant 0 : index
    %c0_3 = arith.constant 0 : index
    %c0_4 = arith.constant 0 : index
    %2 = vector.load %arg3[%c0_2, %c0_3, %c0_4] : memref<1x8x32xf32, #tpu.memory_space<vmem>>, vector<1x8x32xf32>
    %3 = vector.shape_cast %2 : vector<1x8x32xf32> to vector<8x32xf32>
    %c0_5 = arith.constant 0 : index
    %c0_6 = arith.constant 0 : index
    %4 = vector.load %arg4[%c0_5, %c0_6] : memref<32x32xf32, #tpu.memory_space<vmem>>, vector<32x32xf32>
    %cst = arith.constant dense<0.000000e+00> : vector<8x32xf32>
    %5 = tpu.matmul %1, %4, %cst {dimension_numbers = #tpu.dot_dimension_numbers<[1], [0], [0], [1], [0, 0, 1, 1], [], []>} : vector<8x32xf32>, vector<32x32xf32>, vector<8x32xf32> -> vector<8x32xf32>
    %c0_7 = arith.constant 0 : index
    %c0_8 = arith.constant 0 : index
    %6 = vector.load %arg5[%c0_7, %c0_8] : memref<1x32xf32, #tpu.memory_space<vmem>>, vector<1x32xf32>
    %7 = vector.broadcast %6 : vector<1x32xf32> to vector<8x32xf32>
    %8 = arith.addf %5, %7 : vector<8x32xf32>
    %c0_9 = arith.constant 0 : index
    %c0_10 = arith.constant 0 : index
    %9 = vector.load %arg6[%c0_9, %c0_10] : memref<32x64xf32, #tpu.memory_space<vmem>>, vector<32x64xf32>
    %cst_11 = arith.constant dense<0.000000e+00> : vector<8x64xf32>
    %10 = tpu.matmul %3, %9, %cst_11 {dimension_numbers = #tpu.dot_dimension_numbers<[1], [0], [0], [1], [0, 0, 1, 1], [], []>} : vector<8x32xf32>, vector<32x64xf32>, vector<8x64xf32> -> vector<8x64xf32>
    %c0_12 = arith.constant 0 : index
    %c0_13 = arith.constant 0 : index
    %11 = vector.load %arg7[%c0_12, %c0_13] : memref<1x64xf32, #tpu.memory_space<vmem>>, vector<1x64xf32>
    %12 = vector.broadcast %11 : vector<1x64xf32> to vector<8x64xf32>
    %13 = arith.addf %10, %12 : vector<8x64xf32>
    %14 = vector.extract_strided_slice %13 {offsets = [0, 0], sizes = [8, 32], strides = [1, 1]} : vector<8x64xf32> to vector<8x32xf32>
    %15 = vector.extract_strided_slice %13 {offsets = [0, 32], sizes = [8, 32], strides = [1, 1]} : vector<8x64xf32> to vector<8x32xf32>
    %16 = vector.extract_strided_slice %8 {offsets = [0, 0], sizes = [8, 8], strides = [1, 1]} : vector<8x32xf32> to vector<8x8xf32>
    %17 = vector.extract_strided_slice %14 {offsets = [0, 0], sizes = [8, 8], strides = [1, 1]} : vector<8x32xf32> to vector<8x8xf32>
    %18 = vector.extract_strided_slice %15 {offsets = [0, 0], sizes = [8, 8], strides = [1, 1]} : vector<8x32xf32> to vector<8x8xf32>
    %cst_14 = arith.constant dense<0.000000e+00> : vector<8x8xf32>
    %19 = tpu.matmul %16, %17, %cst_14 {dimension_numbers = #tpu.dot_dimension_numbers<[1], [1], [0], [0], [0, 0, 1, 0], [], []>} : vector<8x8xf32>, vector<8x8xf32>, vector<8x8xf32> -> vector<8x8xf32>
    %cst_15 = arith.constant 0.353553385 : f32
    %20 = vector.broadcast %cst_15 : f32 to vector<8x8xf32>
    %21 = arith.mulf %19, %20 : vector<8x8xf32>
    %cst_16 = arith.constant dense<0xFF800000> : vector<8xf32>
    %22 = vector.multi_reduction <maximumf>, %21, %cst_16 [1] : vector<8x8xf32> to vector<8xf32>
    %23 = vector.shape_cast %22 : vector<8xf32> to vector<8x1xf32>
    %24 = vector.broadcast %23 : vector<8x1xf32> to vector<8x8xf32>
    %25 = arith.subf %21, %24 : vector<8x8xf32>
    %26 = math.exp %25 : vector<8x8xf32>
    %cst_17 = arith.constant dense<0.000000e+00> : vector<8xf32>
    %27 = vector.multi_reduction <add>, %26, %cst_17 [1] : vector<8x8xf32> to vector<8xf32>
    %28 = vector.shape_cast %27 : vector<8xf32> to vector<8x1xf32>
    %29 = tpu.reciprocal %28 {approx = true} : vector<8x1xf32> -> vector<8x1xf32>
    %30 = vector.broadcast %29 : vector<8x1xf32> to vector<8x8xf32>
    %31 = arith.mulf %26, %30 : vector<8x8xf32>
    %cst_18 = arith.constant dense<0.000000e+00> : vector<8x8xf32>
    %32 = tpu.matmul %31, %18, %cst_18 {dimension_numbers = #tpu.dot_dimension_numbers<[1], [0], [0], [1], [0, 0, 1, 1], [], []>} : vector<8x8xf32>, vector<8x8xf32>, vector<8x8xf32> -> vector<8x8xf32>
    %c0_19 = arith.constant 0 : index
    %c0_20 = arith.constant 0 : index
    %33 = vector.load %arg11[%c0_19, %c0_20] : memref<8x32xf32, #tpu.memory_space<vmem>>, vector<8x8xf32>
    tpu.vector_store %arg11[%c0_19, %c0_20], %32 {strides = array<i32>} : memref<8x32xf32, #tpu.memory_space<vmem>>, vector<8x8xf32>,
    %34 = vector.extract_strided_slice %8 {offsets = [0, 8], sizes = [8, 8], strides = [1, 1]} : vector<8x32xf32> to vector<8x8xf32>
    %35 = vector.extract_strided_slice %14 {offsets = [0, 8], sizes = [8, 8], strides = [1, 1]} : vector<8x32xf32> to vector<8x8xf32>
    %36 = vector.extract_strided_slice %15 {offsets = [0, 8], sizes = [8, 8], strides = [1, 1]} : vector<8x32xf32> to vector<8x8xf32>
    %cst_21 = arith.constant dense<0.000000e+00> : vector<8x8xf32>
    %37 = tpu.matmul %34, %35, %cst_21 {dimension_numbers = #tpu.dot_dimension_numbers<[1], [1], [0], [0], [0, 0, 1, 0], [], []>} : vector<8x8xf32>, vector<8x8xf32>, vector<8x8xf32> -> vector<8x8xf32>
    %cst_22 = arith.constant 0.353553385 : f32
    %38 = vector.broadcast %cst_22 : f32 to vector<8x8xf32>
    %39 = arith.mulf %37, %38 : vector<8x8xf32>
    %cst_23 = arith.constant dense<0xFF800000> : vector<8xf32>
    %40 = vector.multi_reduction <maximumf>, %39, %cst_23 [1] : vector<8x8xf32> to vector<8xf32>
    %41 = vector.shape_cast %40 : vector<8xf32> to vector<8x1xf32>
    %42 = vector.broadcast %41 : vector<8x1xf32> to vector<8x8xf32>
    %43 = arith.subf %39, %42 : vector<8x8xf32>
    %44 = math.exp %43 : vector<8x8xf32>
    %cst_24 = arith.constant dense<0.000000e+00> : vector<8xf32>
    %45 = vector.multi_reduction <add>, %44, %cst_24 [1] : vector<8x8xf32> to vector<8xf32>
    %46 = vector.shape_cast %45 : vector<8xf32> to vector<8x1xf32>
    %47 = tpu.reciprocal %46 {approx = true} : vector<8x1xf32> -> vector<8x1xf32>
    %48 = vector.broadcast %47 : vector<8x1xf32> to vector<8x8xf32>
    %49 = arith.mulf %44, %48 : vector<8x8xf32>
    %cst_25 = arith.constant dense<0.000000e+00> : vector<8x8xf32>
    %50 = tpu.matmul %49, %36, %cst_25 {dimension_numbers = #tpu.dot_dimension_numbers<[1], [0], [0], [1], [0, 0, 1, 1], [], []>} : vector<8x8xf32>, vector<8x8xf32>, vector<8x8xf32> -> vector<8x8xf32>
    %c0_26 = arith.constant 0 : index
    %c8 = arith.constant 8 : index
    %51 = vector.load %arg11[%c0_26, %c8] : memref<8x32xf32, #tpu.memory_space<vmem>>, vector<8x8xf32>
    tpu.vector_store %arg11[%c0_26, %c8], %50 {strides = array<i32>} : memref<8x32xf32, #tpu.memory_space<vmem>>, vector<8x8xf32>,
    %52 = vector.extract_strided_slice %8 {offsets = [0, 16], sizes = [8, 8], strides = [1, 1]} : vector<8x32xf32> to vector<8x8xf32>
    %53 = vector.extract_strided_slice %14 {offsets = [0, 16], sizes = [8, 8], strides = [1, 1]} : vector<8x32xf32> to vector<8x8xf32>
    %54 = vector.extract_strided_slice %15 {offsets = [0, 16], sizes = [8, 8], strides = [1, 1]} : vector<8x32xf32> to vector<8x8xf32>
    %cst_27 = arith.constant dense<0.000000e+00> : vector<8x8xf32>
    %55 = tpu.matmul %52, %53, %cst_27 {dimension_numbers = #tpu.dot_dimension_numbers<[1], [1], [0], [0], [0, 0, 1, 0], [], []>} : vector<8x8xf32>, vector<8x8xf32>, vector<8x8xf32> -> vector<8x8xf32>
    %cst_28 = arith.constant 0.353553385 : f32
    %56 = vector.broadcast %cst_28 : f32 to vector<8x8xf32>
    %57 = arith.mulf %55, %56 : vector<8x8xf32>
    %cst_29 = arith.constant dense<0xFF800000> : vector<8xf32>
    %58 = vector.multi_reduction <maximumf>, %57, %cst_29 [1] : vector<8x8xf32> to vector<8xf32>
    %59 = vector.shape_cast %58 : vector<8xf32> to vector<8x1xf32>
    %60 = vector.broadcast %59 : vector<8x1xf32> to vector<8x8xf32>
    %61 = arith.subf %57, %60 : vector<8x8xf32>
    %62 = math.exp %61 : vector<8x8xf32>
    %cst_30 = arith.constant dense<0.000000e+00> : vector<8xf32>
    %63 = vector.multi_reduction <add>, %62, %cst_30 [1] : vector<8x8xf32> to vector<8xf32>
    %64 = vector.shape_cast %63 : vector<8xf32> to vector<8x1xf32>
    %65 = tpu.reciprocal %64 {approx = true} : vector<8x1xf32> -> vector<8x1xf32>
    %66 = vector.broadcast %65 : vector<8x1xf32> to vector<8x8xf32>
    %67 = arith.mulf %62, %66 : vector<8x8xf32>
    %cst_31 = arith.constant dense<0.000000e+00> : vector<8x8xf32>
    %68 = tpu.matmul %67, %54, %cst_31 {dimension_numbers = #tpu.dot_dimension_numbers<[1], [0], [0], [1], [0, 0, 1, 1], [], []>} : vector<8x8xf32>, vector<8x8xf32>, vector<8x8xf32> -> vector<8x8xf32>
    %c0_32 = arith.constant 0 : index
    %c16 = arith.constant 16 : index
    %69 = vector.load %arg11[%c0_32, %c16] : memref<8x32xf32, #tpu.memory_space<vmem>>, vector<8x8xf32>
    tpu.vector_store %arg11[%c0_32, %c16], %68 {strides = array<i32>} : memref<8x32xf32, #tpu.memory_space<vmem>>, vector<8x8xf32>,
    %70 = vector.extract_strided_slice %8 {offsets = [0, 24], sizes = [8, 8], strides = [1, 1]} : vector<8x32xf32> to vector<8x8xf32>
    %71 = vector.extract_strided_slice %14 {offsets = [0, 24], sizes = [8, 8], strides = [1, 1]} : vector<8x32xf32> to vector<8x8xf32>
    %72 = vector.extract_strided_slice %15 {offsets = [0, 24], sizes = [8, 8], strides = [1, 1]} : vector<8x32xf32> to vector<8x8xf32>
    %cst_33 = arith.constant dense<0.000000e+00> : vector<8x8xf32>
    %73 = tpu.matmul %70, %71, %cst_33 {dimension_numbers = #tpu.dot_dimension_numbers<[1], [1], [0], [0], [0, 0, 1, 0], [], []>} : vector<8x8xf32>, vector<8x8xf32>, vector<8x8xf32> -> vector<8x8xf32>
    %cst_34 = arith.constant 0.353553385 : f32
    %74 = vector.broadcast %cst_34 : f32 to vector<8x8xf32>
    %75 = arith.mulf %73, %74 : vector<8x8xf32>
    %cst_35 = arith.constant dense<0xFF800000> : vector<8xf32>
    %76 = vector.multi_reduction <maximumf>, %75, %cst_35 [1] : vector<8x8xf32> to vector<8xf32>
    %77 = vector.shape_cast %76 : vector<8xf32> to vector<8x1xf32>
    %78 = vector.broadcast %77 : vector<8x1xf32> to vector<8x8xf32>
    %79 = arith.subf %75, %78 : vector<8x8xf32>
    %80 = math.exp %79 : vector<8x8xf32>
    %cst_36 = arith.constant dense<0.000000e+00> : vector<8xf32>
    %81 = vector.multi_reduction <add>, %80, %cst_36 [1] : vector<8x8xf32> to vector<8xf32>
    %82 = vector.shape_cast %81 : vector<8xf32> to vector<8x1xf32>
    %83 = tpu.reciprocal %82 {approx = true} : vector<8x1xf32> -> vector<8x1xf32>
    %84 = vector.broadcast %83 : vector<8x1xf32> to vector<8x8xf32>
    %85 = arith.mulf %80, %84 : vector<8x8xf32>
    %cst_37 = arith.constant dense<0.000000e+00> : vector<8x8xf32>
    %86 = tpu.matmul %85, %72, %cst_37 {dimension_numbers = #tpu.dot_dimension_numbers<[1], [0], [0], [1], [0, 0, 1, 1], [], []>} : vector<8x8xf32>, vector<8x8xf32>, vector<8x8xf32> -> vector<8x8xf32>
    %c0_38 = arith.constant 0 : index
    %c24 = arith.constant 24 : index
    %87 = vector.load %arg11[%c0_38, %c24] : memref<8x32xf32, #tpu.memory_space<vmem>>, vector<8x8xf32>
    tpu.vector_store %arg11[%c0_38, %c24], %86 {strides = array<i32>} : memref<8x32xf32, #tpu.memory_space<vmem>>, vector<8x8xf32>,
    %c0_39 = arith.constant 0 : index
    %c0_40 = arith.constant 0 : index
    %88 = vector.load %arg11[%c0_39, %c0_40] : memref<8x32xf32, #tpu.memory_space<vmem>>, vector<8x32xf32>
    %c0_41 = arith.constant 0 : index
    %c0_42 = arith.constant 0 : index
    %89 = vector.load %arg8[%c0_41, %c0_42] : memref<32x32xf32, #tpu.memory_space<vmem>>, vector<32x32xf32>
    %cst_43 = arith.constant dense<0.000000e+00> : vector<8x32xf32>
    %90 = tpu.matmul %88, %89, %cst_43 {dimension_numbers = #tpu.dot_dimension_numbers<[1], [0], [0], [1], [0, 0, 1, 1], [], []>} : vector<8x32xf32>, vector<32x32xf32>, vector<8x32xf32> -> vector<8x32xf32>
    %c0_44 = arith.constant 0 : index
    %c0_45 = arith.constant 0 : index
    %91 = vector.load %arg9[%c0_44, %c0_45] : memref<1x32xf32, #tpu.memory_space<vmem>>, vector<1x32xf32>
    %92 = vector.broadcast %91 : vector<1x32xf32> to vector<8x32xf32>
    %93 = arith.addf %90, %92 : vector<8x32xf32>
    %c0_46 = arith.constant 0 : index
    %c0_47 = arith.constant 0 : index
    %c0_48 = arith.constant 0 : index
    %94 = vector.load %arg10[%c0_46, %c0_47, %c0_48] : memref<1x8x32xf32, #tpu.memory_space<vmem>>, vector<1x8x32xf32>
    %95 = vector.shape_cast %94 : vector<1x8x32xf32> to vector<8x32xf32>
    %96 = vector.shape_cast %93 : vector<8x32xf32> to vector<1x8x32xf32>
    tpu.vector_store %arg10[%c0_46, %c0_47, %c0_48], %96 {strides = array<i32>} : memref<1x8x32xf32, #tpu.memory_space<vmem>>, vector<1x8x32xf32>,
    return
  }
  func.func @transform_0(%arg0: i32, %arg1: i32) -> (i32, i32, i32) {
    %c0_i32 = arith.constant 0 : i32
    %c0_i32_0 = arith.constant 0 : i32
    return %arg0, %arg1, %c0_i32 : i32, i32, i32
  }
  func.func @transform_1(%arg0: i32, %arg1: i32) -> (i32, i32, i32) {
    %c0_i32 = arith.constant 0 : i32
    %c0_i32_0 = arith.constant 0 : i32
    %c0_i32_1 = arith.constant 0 : i32
    return %arg0, %c0_i32, %c0_i32_0 : i32, i32, i32
  }
  func.func @transform_2(%arg0: i32, %arg1: i32) -> (i32, i32) {
    %c0_i32 = arith.constant 0 : i32
    %c0_i32_0 = arith.constant 0 : i32
    %c0_i32_1 = arith.constant 0 : i32
    return %c0_i32, %c0_i32_0 : i32, i32
  }
  func.func @transform_3(%arg0: i32, %arg1: i32) -> (i32, i32) {
    %c0_i32 = arith.constant 0 : i32
    %c0_i32_0 = arith.constant 0 : i32
    %c0_i32_1 = arith.constant 0 : i32
    return %c0_i32, %c0_i32_0 : i32, i32
  }
  func.func @transform_4(%arg0: i32, %arg1: i32) -> (i32, i32) {
    %c0_i32 = arith.constant 0 : i32
    %c0_i32_0 = arith.constant 0 : i32
    %c0_i32_1 = arith.constant 0 : i32
    return %c0_i32, %c0_i32_0 : i32, i32
  }
  func.func @transform_5(%arg0: i32, %arg1: i32) -> (i32, i32) {
    %c0_i32 = arith.constant 0 : i32
    %c0_i32_0 = arith.constant 0 : i32
    %c0_i32_1 = arith.constant 0 : i32
    return %c0_i32, %c0_i32_0 : i32, i32
  }
  func.func @transform_6(%arg0: i32, %arg1: i32) -> (i32, i32) {
    %c0_i32 = arith.constant 0 : i32
    %c0_i32_0 = arith.constant 0 : i32
    %c0_i32_1 = arith.constant 0 : i32
    return %c0_i32, %c0_i32_0 : i32, i32
  }
  func.func @transform_7(%arg0: i32, %arg1: i32) -> (i32, i32) {
    %c0_i32 = arith.constant 0 : i32
    %c0_i32_0 = arith.constant 0 : i32
    %c0_i32_1 = arith.constant 0 : i32
    return %c0_i32, %c0_i32_0 : i32, i32
  }
  func.func @transform_8(%arg0: i32, %arg1: i32) -> (i32, i32, i32) {
    %c0_i32 = arith.constant 0 : i32
    %c0_i32_0 = arith.constant 0 : i32
    return %arg0, %arg1, %c0_i32 : i32, i32, i32
  }
}

</mosaic_0001>

<llo_original>
// kernel: tpu_custom_call.1
$region0: #{tpu_custom_call.1}
  #allocation0 [shape = 'u32[]', space=smem, size = 0x4, offset = 0x4, fixed_abs, tag = 'smem constant byte address 0x4 - core index']
  #allocation1 [shape = 'u32[144,128]{1,0:T(1,128)}', space=vmem, size = 0x12000, scoped, tag = 'internal scratch']
  #allocation2 [shape = 'f32[8,32]{1,0:T(8,128)}', space=vmem, size = 0x1000, scoped, tag = 'scratch operand']
  %s0 = inlined_call_operand.hbm [shape: f32[2,8,32], index: 0, kind: input, shape index: {}]
  %s1 = inlined_call_operand.hbm [shape: f32[2,8,32], index: 1, kind: input, shape index: {}]
  %s2 = inlined_call_operand.hbm [shape: f32[32,32], index: 2, kind: input, shape index: {}]
  %s3 = inlined_call_operand.vmem [shape: f32[1,32], index: 3, kind: input, shape index: {}]
  %s4 = inlined_call_operand.hbm [shape: f32[32,64], index: 4, kind: input, shape index: {}]
  %s5 = inlined_call_operand.vmem [shape: f32[1,64], index: 5, kind: input, shape index: {}]
  %s6 = inlined_call_operand.hbm [shape: f32[32,32], index: 6, kind: input, shape index: {}]
  %s7 = inlined_call_operand.vmem [shape: f32[1,32], index: 7, kind: input, shape index: {}]
  %s8 = inlined_call_operand.hbm [shape: f32[2,8,32], index: 8, kind: output, shape index: {}]
  %s9 = sld [smem:[#allocation0]]
  $region85: #{tpu_custom_call.1} parent=0
    _
  %s11 = ssub.s32 1, %s9
  %s12 = scalar_select 0, %s11, %s9
  $region1: #{tpu_custom_call.1} parent=0
    #allocation3 [shape = 'u8[8192]{0}', space=vmem, size = 0x2000, scoped, tag = 'input window, operand 0']
    #allocation4 [shape = 's32[2]{0}', space=sflag, size = 0x8, scoped, tag = 'scoped memory for tpu_custom_call.1']
    #allocation5 [shape = 's32[2]{0}', space=sflag, size = 0x8, scoped, tag = 'scoped memory for tpu_custom_call.1']
    #allocation6 [shape = 'u8[8192]{0}', space=vmem, size = 0x2000, scoped, tag = 'input window, operand 1']
    #allocation7 [shape = 's32[2]{0}', space=sflag, size = 0x8, scoped, tag = 'scoped memory for tpu_custom_call.1']
    #allocation8 [shape = 'u8[16384]{0}', space=vmem, size = 0x4000, scoped, tag = 'input window, operand 2, single buffered']
    #allocation9 [shape = 'u8[16384]{0}', space=vmem, size = 0x4000, scoped, tag = 'input window, operand 4, single buffered']
    #allocation10 [shape = 's32[1]{0}', space=sflag, size = 0x4, scoped, tag = 'scoped memory for tpu_custom_call.1']
    #allocation11 [shape = 'u8[16384]{0}', space=vmem, size = 0x4000, scoped, tag = 'input window, operand 6, single buffered']
    #allocation12 [shape = 'u8[8192]{0}', space=vmem, size = 0x2000, scoped, tag = 'output window, operand 0']
    %13 = vsyncpa [#allocation4], 0
    %s14 = scalar_lea.sflag [#allocation4], 1
    %15 = vsyncpa %s14, 0
    %16 = vsyncpa [#allocation7], 0
    %s17 = scalar_lea.sflag [#allocation7], 1
    %18 = vsyncpa %s17, 0
    %19 = vsyncpa [#allocation10], 0
    %20 = vsyncpa [#allocation5], 0
    %s21 = scalar_lea.sflag [#allocation5], 1
    %22 = vsyncpa %s21, 0
    loop: start=0, step=1, limit=4
    $region2: #{tpu_custom_call.1} parent=1 // loop_pre_header
      _
    $region3: #{tpu_custom_call.1} parent=1 // loop_header
      %s24 = sphi 0, %s28
      %p25 = scmp.ge.s32.totalorder %s24, 4
      %s31 = sphi 0, %s43
      %s32 = sphi 0, %s39
      %s33 = sphi 0, %s31
      %s34 = sphi 0, %s32
      %s35 = sphi 0, %s33
      %s36 = sphi 0, %s34
      %s48 = sphi 0, %s50
      %s51 = sphi 0, %s48
      %s52 = sphi 0, %s51
      %s68 = sphi 0, %s52
      %s74 = sphi 0, %s76
      %s77 = sphi 0, %s74
      %s78 = sphi 0, %s77
      %s94 = sphi 0, %s78
      %s98 = sphi 0, %s98
      %s100 = sphi 0, %s98
      %s101 = sphi 0, %s100
      %s115 = sphi 0, %s101
      %s119 = sphi 0, %s119
      %s121 = sphi 0, %s119
      %s122 = sphi 0, %s121
      %s136 = sphi 0, %s122
      %s140 = sphi 0, %s140
      %s142 = sphi 0, %s140
      %s143 = sphi 0, %s142
      %s157 = sphi 0, %s143
      %s161 = sphi 0, %s161
      %s163 = sphi 0, %s161
      %s164 = sphi 0, %s163
      %s178 = sphi 0, %s164
      %s182 = sphi 0, %s182
      %s184 = sphi 0, %s182
      %s185 = sphi 0, %s184
      %s199 = sphi 0, %s185
      %s203 = sphi 0, %s203
      %s205 = sphi 0, %s203
      %s206 = sphi 0, %s205
      %s220 = sphi 0, %s206
      %s228 = sphi 0, %s230
      %s231 = sphi 0, %s228
      %s232 = sphi 0, %s231
      %s248 = sphi 0, %s232
    $region4: #{tpu_custom_call.1} parent=1 // loop_header_branch
      %27 = sbr.rel (%p25) target = $region8
    $region5: #{tpu_custom_call.1} parent=1 // loop_body
      %s29 = ssub.s32 %s24, 1
      %s30 = ssub.s32 %s24, 2
      %s37 = sadd.s32 1, %s32
      %p38 = scmp.ge.s32.totalorder %s37, 1
      %s39 = scalar_select %p38, 0, %s37
      %s40 = sadd.s32 1, %s31
      %s41 = scalar_select %p38, %s40, %s31
      %p42 = scmp.ge.s32.totalorder %s41, 2
      %s43 = scalar_select %p42, 0, %s41
      %s44 = ssub.s32 %s31, %s43
      %s45 = ssub.s32 %s32, %s39
      %s46 = sor.u32 %s44, %s45
      %p47 = scmp.eq.s32.totalorder %s46, 0
      %s49 = sadd.s32 %s48, 1
      %s50 = scalar_select %p47, %s48, %s49
      %p53 = pneg %p47
      %p54 = scmp.eq.s32.totalorder %s24, 1
      %p55 = por %p53, %p54
      %p56 = scmp.ne.s32.totalorder %s48, %s51
      %p57 = scmp.eq.s32.totalorder %s24, 0
      %p58 = por %p56, %p57
      %p59 = scmp.ne.s32.totalorder %s48, %s51
      %p60 = scmp.eq.s32.totalorder %s29, 1
      %p61 = por %p59, %p60
      %p62 = scmp.ne.s32.totalorder %s51, %s52
      %p63 = scmp.eq.s32.totalorder %s29, 0
      %p64 = por %p62, %p63
      %p65 = scmp.ne.s32.totalorder %s51, %s52
      %p66 = scmp.eq.s32.totalorder %s30, 1
      %p67 = por %p65, %p66
      %p69 = scmp.ne.s32.totalorder %s52, %s68
      %p70 = scmp.eq.s32.totalorder %s30, 0
      %p71 = por %p69, %p70
      %s72 = ssub.s32 %s31, %s43
      %p73 = scmp.eq.s32.totalorder %s72, 0
      %s75 = sadd.s32 %s74, 1
      %s76 = scalar_select %p73, %s74, %s75
      %p79 = pneg %p73
      %p80 = scmp.eq.s32.totalorder %s24, 1
      %p81 = por %p79, %p80
      %p82 = scmp.ne.s32.totalorder %s74, %s77
      %p83 = scmp.eq.s32.totalorder %s24, 0
      %p84 = por %p82, %p83
      %p85 = scmp.ne.s32.totalorder %s74, %s77
      %p86 = scmp.eq.s32.totalorder %s29, 1
      %p87 = por %p85, %p86
      %p88 = scmp.ne.s32.totalorder %s77, %s78
      %p89 = scmp.eq.s32.totalorder %s29, 0
      %p90 = por %p88, %p89
      %p91 = scmp.ne.s32.totalorder %s77, %s78
      %p92 = scmp.eq.s32.totalorder %s30, 1
      %p93 = por %p91, %p92
      %p95 = scmp.ne.s32.totalorder %s78, %s94
      %p96 = scmp.eq.s32.totalorder %s30, 0
      %p97 = por %p95, %p96
      %s99 = sadd.s32 %s98, 1
      %p102 = scmp.eq.s32.totalorder %s24, 1
      %p103 = scmp.ne.s32.totalorder %s98, %s100
      %p104 = scmp.eq.s32.totalorder %s24, 0
      %p105 = por %p103, %p104
      %p106 = scmp.ne.s32.totalorder %s98, %s100
      %p107 = scmp.eq.s32.totalorder %s29, 1
      %p108 = por %p106, %p107
      %p109 = scmp.ne.s32.totalorder %s100, %s101
      %p110 = scmp.eq.s32.totalorder %s29, 0
      %p111 = por %p109, %p110
      %p112 = scmp.ne.s32.totalorder %s100, %s101
      %p113 = scmp.eq.s32.totalorder %s30, 1
      %p114 = por %p112, %p113
      %p116 = scmp.ne.s32.totalorder %s101, %s115
      %p117 = scmp.eq.s32.totalorder %s30, 0
      %p118 = por %p116, %p117
      %s120 = sadd.s32 %s119, 1
      %p123 = scmp.eq.s32.totalorder %s24, 1
      %p124 = scmp.ne.s32.totalorder %s119, %s121
      %p125 = scmp.eq.s32.totalorder %s24, 0
      %p126 = por %p124, %p125
      %p127 = scmp.ne.s32.totalorder %s119, %s121
      %p128 = scmp.eq.s32.totalorder %s29, 1
      %p129 = por %p127, %p128
      %p130 = scmp.ne.s32.totalorder %s121, %s122
      %p131 = scmp.eq.s32.totalorder %s29, 0
      %p132 = por %p130, %p131
      %p133 = scmp.ne.s32.totalorder %s121, %s122
      %p134 = scmp.eq.s32.totalorder %s30, 1
      %p135 = por %p133, %p134
      %p137 = scmp.ne.s32.totalorder %s122, %s136
      %p138 = scmp.eq.s32.totalorder %s30, 0
      %p139 = por %p137, %p138
      %s141 = sadd.s32 %s140, 1
      %p144 = scmp.eq.s32.totalorder %s24, 1
      %p145 = scmp.ne.s32.totalorder %s140, %s142
      %p146 = scmp.eq.s32.totalorder %s24, 0
      %p147 = por %p145, %p146
      %p148 = scmp.ne.s32.totalorder %s140, %s142
      %p149 = scmp.eq.s32.totalorder %s29, 1
      %p150 = por %p148, %p149
      %p151 = scmp.ne.s32.totalorder %s142, %s143
      %p152 = scmp.eq.s32.totalorder %s29, 0
      %p153 = por %p151, %p152
      %p154 = scmp.ne.s32.totalorder %s142, %s143
      %p155 = scmp.eq.s32.totalorder %s30, 1
      %p156 = por %p154, %p155
      %p158 = scmp.ne.s32.totalorder %s143, %s157
      %p159 = scmp.eq.s32.totalorder %s30, 0
      %p160 = por %p158, %p159
      %s162 = sadd.s32 %s161, 1
      %p165 = scmp.eq.s32.totalorder %s24, 1
      %p166 = scmp.ne.s32.totalorder %s161, %s163
      %p167 = scmp.eq.s32.totalorder %s24, 0
      %p168 = por %p166, %p167
      %p169 = scmp.ne.s32.totalorder %s161, %s163
      %p170 = scmp.eq.s32.totalorder %s29, 1
      %p171 = por %p169, %p170
      %p172 = scmp.ne.s32.totalorder %s163, %s164
      %p173 = scmp.eq.s32.totalorder %s29, 0
      %p174 = por %p172, %p173
      %p175 = scmp.ne.s32.totalorder %s163, %s164
      %p176 = scmp.eq.s32.totalorder %s30, 1
      %p177 = por %p175, %p176
      %p179 = scmp.ne.s32.totalorder %s164, %s178
      %p180 = scmp.eq.s32.totalorder %s30, 0
      %p181 = por %p179, %p180
      %s183 = sadd.s32 %s182, 1
      %p186 = scmp.eq.s32.totalorder %s24, 1
      %p187 = scmp.ne.s32.totalorder %s182, %s184
      %p188 = scmp.eq.s32.totalorder %s24, 0
      %p189 = por %p187, %p188
      %p190 = scmp.ne.s32.totalorder %s182, %s184
      %p191 = scmp.eq.s32.totalorder %s29, 1
      %p192 = por %p190, %p191
      %p193 = scmp.ne.s32.totalorder %s184, %s185
      %p194 = scmp.eq.s32.totalorder %s29, 0
      %p195 = por %p193, %p194
      %p196 = scmp.ne.s32.totalorder %s184, %s185
      %p197 = scmp.eq.s32.totalorder %s30, 1
      %p198 = por %p196, %p197
      %p200 = scmp.ne.s32.totalorder %s185, %s199
      %p201 = scmp.eq.s32.totalorder %s30, 0
      %p202 = por %p200, %p201
      %s204 = sadd.s32 %s203, 1
      %p207 = scmp.eq.s32.totalorder %s24, 1
      %p208 = scmp.ne.s32.totalorder %s203, %s205
      %p209 = scmp.eq.s32.totalorder %s24, 0
      %p210 = por %p208, %p209
      %p211 = scmp.ne.s32.totalorder %s203, %s205
      %p212 = scmp.eq.s32.totalorder %s29, 1
      %p213 = por %p211, %p212
      %p214 = scmp.ne.s32.totalorder %s205, %s206
      %p215 = scmp.eq.s32.totalorder %s29, 0
      %p216 = por %p214, %p215
      %p217 = scmp.ne.s32.totalorder %s205, %s206
      %p218 = scmp.eq.s32.totalorder %s30, 1
      %p219 = por %p217, %p218
      %p221 = scmp.ne.s32.totalorder %s206, %s220
      %p222 = scmp.eq.s32.totalorder %s30, 0
      %p223 = por %p221, %p222
      %s224 = ssub.s32 %s31, %s43
      %s225 = ssub.s32 %s32, %s39
      %s226 = sor.u32 %s224, %s225
      %p227 = scmp.eq.s32.totalorder %s226, 0
      %s229 = sadd.s32 %s228, 1
      %s230 = scalar_select %p227, %s228, %s229
      %p233 = pneg %p227
      %p234 = scmp.eq.s32.totalorder %s24, 1
      %p235 = por %p233, %p234
      %p236 = scmp.ne.s32.totalorder %s228, %s231
      %p237 = scmp.eq.s32.totalorder %s24, 0
      %p238 = por %p236, %p237
      %p239 = scmp.ne.s32.totalorder %s228, %s231
      %p240 = scmp.eq.s32.totalorder %s29, 1
      %p241 = por %p239, %p240
      %p242 = scmp.ne.s32.totalorder %s231, %s232
      %p243 = scmp.eq.s32.totalorder %s29, 0
      %p244 = por %p242, %p243
      %p245 = scmp.ne.s32.totalorder %s231, %s232
      %p246 = scmp.eq.s32.totalorder %s30, 1
      %p247 = por %p245, %p246
      %p249 = scmp.ne.s32.totalorder %s232, %s248
      %p250 = scmp.eq.s32.totalorder %s30, 0
      %p251 = por %p249, %p250
      %p252 = scmp.le.s32.totalorder 1, %s24
      %p253 = scmp.lt.s32.totalorder %s24, 3
      %p254 = pnand %p252, %p253
      %p255 = pneg %p254
      // Predicated region
      $region9: #{tpu_custom_call.1} parent=5 // pred_check
        _
      $region10: #{tpu_custom_call.1} parent=5 // pred_check_branch
        %257 = sbr.rel (%p254) target = $region12
      $region11: #{tpu_custom_call.1} parent=5 // pred_region
        %s258 = ssub.s32 %s24, 1
        // Predicated region
        $region13: #{tpu_custom_call.1} parent=11 // pred_check
          %p259 = pneg %p111
        $region14: #{tpu_custom_call.1} parent=11 // pred_check_branch
          %261 = sbr.rel (%p259) target = $region16
        $region15: #{tpu_custom_call.1} parent=11 // pred_region
          %s263 = ssub.s32 512, 512
          %264 = vsyncadd [#allocation7], %s263
          %s265 = sshll.u32 [#allocation8], 4
          %s266 = int_to_ptr.vmem [resolvable:$true] %s265
          %271 = dma.hbm_to_vmem [thread:$0]  %s2, 512, %s266, [#allocation7], 128, 128, 8
        $region16: #{tpu_custom_call.1} parent=11 // pred_fallthru
          _
        // Predicated region
        $region17: #{tpu_custom_call.1} parent=11 // pred_check
          %p272 = pneg %p132
        $region18: #{tpu_custom_call.1} parent=11 // pred_check_branch
          %274 = sbr.rel (%p272) target = $region20
        $region19: #{tpu_custom_call.1} parent=11 // pred_region
          _
        $region20: #{tpu_custom_call.1} parent=11 // pred_fallthru
          _
        // Predicated region
        $region21: #{tpu_custom_call.1} parent=11 // pred_check
          %p275 = pneg %p153
        $region22: #{tpu_custom_call.1} parent=11 // pred_check_branch
          %277 = sbr.rel (%p275) target = $region24
        $region23: #{tpu_custom_call.1} parent=11 // pred_region
          %s279 = ssub.s32 512, 512
          %280 = vsyncadd [#allocation10], %s279
          %s281 = sshll.u32 [#allocation9], 4
          %s282 = int_to_ptr.vmem [resolvable:$true] %s281
          %287 = dma.hbm_to_vmem [thread:$0]  %s4, 512, %s282, [#allocation10], 128, 128, 8
        $region24: #{tpu_custom_call.1} parent=11 // pred_fallthru
          _
        // Predicated region
        $region25: #{tpu_custom_call.1} parent=11 // pred_check
          %p288 = pneg %p174
        $region26: #{tpu_custom_call.1} parent=11 // pred_check_branch
          %290 = sbr.rel (%p288) target = $region28
        $region27: #{tpu_custom_call.1} parent=11 // pred_region
          _
        $region28: #{tpu_custom_call.1} parent=11 // pred_fallthru
          _
        // Predicated region
        $region29: #{tpu_custom_call.1} parent=11 // pred_check
          %p291 = pneg %p195
        $region30: #{tpu_custom_call.1} parent=11 // pred_check_branch
          %293 = sbr.rel (%p291) target = $region32
        $region31: #{tpu_custom_call.1} parent=11 // pred_region
          %s295 = ssub.s32 512, 512
          %296 = vsyncadd [#allocation10], %s295
          %s297 = sshll.u32 [#allocation11], 4
          %s298 = int_to_ptr.vmem [resolvable:$true] %s297
          %303 = dma.hbm_to_vmem [thread:$0]  %s6, 512, %s298, [#allocation10], 128, 128, 8
        $region32: #{tpu_custom_call.1} parent=11 // pred_fallthru
          _
        // Predicated region
        $region33: #{tpu_custom_call.1} parent=11 // pred_check
          %p304 = pneg %p216
        $region34: #{tpu_custom_call.1} parent=11 // pred_check_branch
          %306 = sbr.rel (%p304) target = $region36
        $region35: #{tpu_custom_call.1} parent=11 // pred_region
          _
        $region36: #{tpu_custom_call.1} parent=11 // pred_fallthru
          _
      $region12: #{tpu_custom_call.1} parent=5 // pred_fallthru
        _
      %p307 = scmp.lt.s32.totalorder %s24, 2
      // Predicated region
      $region37: #{tpu_custom_call.1} parent=5 // pred_check
        %p308 = pneg %p307
      $region38: #{tpu_custom_call.1} parent=5 // pred_check_branch
        %310 = sbr.rel (%p308) target = $region40
      $region39: #{tpu_custom_call.1} parent=5 // pred_region
        // Predicated region
        $region41: #{tpu_custom_call.1} parent=39 // pred_check
          %p311 = pneg %p58
        $region42: #{tpu_custom_call.1} parent=39 // pred_check_branch
          %313 = sbr.rel (%p311) target = $region44
        $region43: #{tpu_custom_call.1} parent=39 // pred_region
          %s314 = sand.u32 %s48, 1
          %s315 = scalar_lea.sflag [#allocation4], %s314
          %s316 = sand.u32 %s48, 1
          %s317 = smul.addr %s316, 8
          %s318 = scalar_lea.vmem [#allocation3], %s317
          %s320 = ssub.s32 128, 128
          %321 = vsyncadd %s315, %s320
          %s322 = sadd.s32 %s32, %s31
          %s323 = smul.addr %s322, 128
          %s324 = scalar_lea.hbm %s0, %s323
          %s326 = sshll.u32 %s318, 4
          %s327 = int_to_ptr.vmem [resolvable:$true] %s326
          %329 = dma.hbm_to_vmem [thread:$0]  %s324, 128, %s327, %s315
        $region44: #{tpu_custom_call.1} parent=39 // pred_fallthru
          _
        // Predicated region
        $region45: #{tpu_custom_call.1} parent=39 // pred_check
          %p330 = pneg %p84
        $region46: #{tpu_custom_call.1} parent=39 // pred_check_branch
          %332 = sbr.rel (%p330) target = $region48
        $region47: #{tpu_custom_call.1} parent=39 // pred_region
          %s333 = sand.u32 %s24, 1
          %s334 = scalar_lea.sflag [#allocation7], %s333
          %s335 = sand.u32 %s74, 1
          %s336 = smul.addr %s335, 8
          %s337 = scalar_lea.vmem [#allocation6], %s336
          %s339 = ssub.s32 128, 128
          %340 = vsyncadd %s334, %s339
          %s341 = smul.addr %s31, 128
          %s342 = scalar_lea.hbm %s1, %s341
          %s344 = sshll.u32 %s337, 4
          %s345 = int_to_ptr.vmem [resolvable:$true] %s344
          %347 = dma.hbm_to_vmem [thread:$0]  %s342, 128, %s345, %s334
        $region48: #{tpu_custom_call.1} parent=39 // pred_fallthru
          _
      $region40: #{tpu_custom_call.1} parent=5 // pred_fallthru
        _
      %p348 = scmp.le.s32.totalorder 1, %s24
      %p349 = scmp.lt.s32.totalorder %s24, 3
      %p350 = pnand %p348, %p349
      %p351 = pneg %p350
      // Predicated region
      $region49: #{tpu_custom_call.1} parent=5 // pred_check
        _
      $region50: #{tpu_custom_call.1} parent=5 // pred_check_branch
        %353 = sbr.rel (%p350) target = $region52
      $region51: #{tpu_custom_call.1} parent=5 // pred_region
        %s354 = ssub.s32 %s24, 1
        %s355 = sand.u32 %s51, 1
        %s356 = scalar_lea.sflag [#allocation4], %s355
        %s357 = sand.u32 %s51, 1
        %s358 = smul.addr %s357, 8
        %s359 = scalar_lea.vmem [#allocation3], %s358
        // Predicated region
        $region53: #{tpu_custom_call.1} parent=51 // pred_check
          %p360 = pneg %p64
        $region54: #{tpu_custom_call.1} parent=51 // pred_check_branch
          %362 = sbr.rel (%p360) target = $region56
        $region55: #{tpu_custom_call.1} parent=51 // pred_region
          %363 = dma.done %s356, 128
        $region56: #{tpu_custom_call.1} parent=51 // pred_fallthru
          _
        %s364 = sand.u32 %s29, 1
        %s365 = scalar_lea.sflag [#allocation7], %s364
        %s366 = sand.u32 %s77, 1
        %s367 = smul.addr %s366, 8
        %s368 = scalar_lea.vmem [#allocation6], %s367
        // Predicated region
        $region57: #{tpu_custom_call.1} parent=51 // pred_check
          %p369 = pneg %p90
        $region58: #{tpu_custom_call.1} parent=51 // pred_check_branch
          %371 = sbr.rel (%p369) target = $region60
        $region59: #{tpu_custom_call.1} parent=51 // pred_region
          %372 = dma.done %s365, 128
        $region60: #{tpu_custom_call.1} parent=51 // pred_fallthru
          _
        // Predicated region
        $region61: #{tpu_custom_call.1} parent=51 // pred_check
          %p373 = pneg %p111
        $region62: #{tpu_custom_call.1} parent=51 // pred_check_branch
          %375 = sbr.rel (%p373) target = $region64
        $region63: #{tpu_custom_call.1} parent=51 // pred_region
          %376 = dma.done [#allocation7], 512
        $region64: #{tpu_custom_call.1} parent=51 // pred_fallthru
          _
        // Predicated region
        $region65: #{tpu_custom_call.1} parent=51 // pred_check
          %p377 = pneg %p153
        $region66: #{tpu_custom_call.1} parent=51 // pred_check_branch
          %379 = sbr.rel (%p377) target = $region68
        $region67: #{tpu_custom_call.1} parent=51 // pred_region
          %380 = dma.done [#allocation10], 512
        $region68: #{tpu_custom_call.1} parent=51 // pred_fallthru
          _
        // Predicated region
        $region69: #{tpu_custom_call.1} parent=51 // pred_check
          %p381 = pneg %p195
        $region70: #{tpu_custom_call.1} parent=51 // pred_check_branch
          %383 = sbr.rel (%p381) target = $region72
        $region71: #{tpu_custom_call.1} parent=51 // pred_region
          %384 = dma.done [#allocation10], 512
        $region72: #{tpu_custom_call.1} parent=51 // pred_fallthru
          _
        %s385 = sand.u32 %s51, 1
        %s386 = scalar_lea.sflag [#allocation4], %s385
        %s387 = sand.u32 %s51, 1
        %s388 = smul.addr %s387, 8
        %s389 = scalar_lea.vmem [#allocation3], %s388
        %p390 = pneg %p64
        %p391 = pneg %p61
        %s392 = sand.u32 %s29, 1
        %s393 = scalar_lea.sflag [#allocation7], %s392
        %s394 = sand.u32 %s77, 1
        %s395 = smul.addr %s394, 8
        %s396 = scalar_lea.vmem [#allocation6], %s395
        %p397 = pneg %p90
        %p398 = pneg %p87
        %p399 = pneg %p111
        %p400 = pneg %p108
        %p401 = pneg %p132
        %p402 = pneg %p129
        %p403 = pneg %p153
        %p404 = pneg %p150
        %p405 = pneg %p174
        %p406 = pneg %p171
        %p407 = pneg %p195
        %p408 = pneg %p192
        %p409 = pneg %p216
        %p410 = pneg %p213
        %p411 = pneg %p244
        %p412 = pneg %p241
        %s413 = sand.u32 %s231, 1
        %s414 = scalar_lea.sflag [#allocation5], %s413
        %s415 = sand.u32 %s231, 1
        %s416 = smul.addr %s415, 8
        %s417 = scalar_lea.vmem [#allocation12], %s416
        %v418 = vld [vmem:[%s359] sm:$0xff]
        %v419 = vld [vmem:[%s368] sm:$0xff]
        %v420 = vld [vmem:[#allocation8] sm:$0xff]
        %v421 = vld [vmem:[#allocation8 + $0x8] sm:$0xff]
        %v422 = vld [vmem:[#allocation8 + $0x10] sm:$0xff]
        %v423 = vld [vmem:[#allocation8 + $0x18] sm:$0xff]
        %v424 = vld [vmem:[%s3] sm:$0x1]
        %v426 = vlaneseq
        %v427 = vshrl.u32 %v426, 7
        %v428 = vsub.s32 0, %v427
        %v429 = vrot.slane %v424, %v428
        %vm431 = vcmask 261120
        %v433 = vsel %vm431, %v418, 0
        %435 = vmatprep.subr.mxu0 0.0
        %436 = vmatpush1.msra.mxu0 %v420
        %437 = vmatprep.subr.mxu0 0.0
        %438 = vmatpush1.msra.mxu0 %v421
        %439 = vmatprep.subr.mxu0 0.0
        %440 = vmatpush1.msra.mxu0 %v422
        %441 = vmatprep.subr.mxu0 0.0
        %442 = vmatpush1.msra.mxu0 %v423
        %443 = vmatprep.subr.mxu0 0.0
        %444 = vmatpush1.msra.mxu0 0.0
        %445 = vmatprep.subr.mxu0 0.0
        %446 = vmatpush1.msra.mxu0 0.0
        %447 = vmatprep.subr.mxu0 0.0
        %448 = vmatpush1.msra.mxu0 0.0
        %449 = vmatprep.subr.mxu0 0.0
        %450 = vmatpush1.msra.mxu0 0.0
        %451 = vmatprep.subr.mxu0 0.0
        %452 = vmatpush1.msra.mxu0 0.0
        %453 = vmatprep.subr.mxu0 0.0
        %454 = vmatpush1.msra.mxu0 0.0
        %455 = vmatprep.subr.mxu0 0.0
        %456 = vmatpush1.msra.mxu0 0.0
        %457 = vmatprep.subr.mxu0 0.0
        %458 = vmatpush1.msra.mxu0 0.0
        %459 = vmatprep.subr.mxu0 0.0
        %460 = vmatpush1.msra.mxu0 0.0
        %461 = vmatprep.subr.mxu0 0.0
        %462 = vmatpush1.msra.mxu0 0.0
        %463 = vmatprep.subr.mxu0 0.0
        %464 = vmatpush1.msra.mxu0 0.0
        %465 = vmatprep.subr.mxu0 0.0
        %466 = vmatpush1.msra.mxu0 0.0
        %467 = vmatprep.subr.mxu0 0.0
        %468 = vmatpush1.msra.mxu0 0.0
        %469 = vmatprep.subr.mxu0 0.0
        %470 = vmatpush1.msra.mxu0 0.0
        %471 = vmatprep.subr.mxu0 0.0
        %472 = vmatpush1.msra.mxu0 0.0
        %473 = vmatprep.subr.mxu0 0.0
        %474 = vmatpush1.msra.mxu0 0.0
        %475 = vmatprep.subr.mxu0 0.0
        %476 = vmatpush1.msra.mxu0 0.0
        %477 = vmatprep.subr.mxu0 0.0
        %478 = vmatpush1.msra.mxu0 0.0
        %479 = vmatprep.subr.mxu0 0.0
        %480 = vmatpush1.msra.mxu0 0.0
        %481 = vmatprep.subr.mxu0 0.0
        %482 = vmatpush1.msra.mxu0 0.0
        %483 = vmatprep.subr.mxu0 0.0
        %484 = vmatpush1.msra.mxu0 0.0
        %485 = vmatprep.subr.mxu0 0.0
        %486 = vmatpush1.msra.mxu0 0.0
        %487 = vmatprep.subr.mxu0 0.0
        %488 = vmatpush1.msra.mxu0 0.0
        %489 = vmatprep.subr.mxu0 0.0
        %490 = vmatpush1.msra.mxu0 0.0
        %491 = vmatprep.subr.mxu0 0.0
        %492 = vmatpush1.msra.mxu0 0.0
        %493 = vmatprep.subr.mxu0 0.0
        %494 = vmatpush1.msra.mxu0 0.0
        %495 = vmatprep.subr.mxu0 0.0
        %496 = vmatpush1.msra.mxu0 0.0
        %497 = vmatprep.subr.mxu0 0.0
        %498 = vmatpush1.msra.mxu0 0.0
        %499 = vmatprep.mubr.f32.mxu0 0.0
        %500 = vmatmul.mubr.f32.gmra.mrb[0].mxu0 %v433
        %v501 = vpop.f32.mrb[0].mxu0
        %v502 = vadd.f32 %v429, %v501
        %v503 = vpop.f32.mrb[0].mxu0
        %504 = vdwg.mxu0
        %v505 = vld [vmem:[#allocation9] sm:$0xff]
        %v506 = vld [vmem:[#allocation9 + $0x8] sm:$0xff]
        %v507 = vld [vmem:[#allocation9 + $0x10] sm:$0xff]
        %v508 = vld [vmem:[#allocation9 + $0x18] sm:$0xff]
        %v509 = vld [vmem:[%s5] sm:$0x1]
        %v511 = vlaneseq
        %v512 = vshrl.u32 %v511, 7
        %v513 = vsub.s32 0, %v512
        %v514 = vrot.slane %v509, %v513
        %v517 = vsel %vm431, %v419, 0
        %519 = vmatprep.subr.mxu0 0.0
        %520 = vmatpush1.msra.mxu0 %v505
        %521 = vmatprep.subr.mxu0 0.0
        %522 = vmatpush1.msra.mxu0 %v506
        %523 = vmatprep.subr.mxu0 0.0
        %524 = vmatpush1.msra.mxu0 %v507
        %525 = vmatprep.subr.mxu0 0.0
        %526 = vmatpush1.msra.mxu0 %v508
        %527 = vmatprep.subr.mxu0 0.0
        %528 = vmatpush1.msra.mxu0 0.0
        %529 = vmatprep.subr.mxu0 0.0
        %530 = vmatpush1.msra.mxu0 0.0
        %531 = vmatprep.subr.mxu0 0.0
        %532 = vmatpush1.msra.mxu0 0.0
        %533 = vmatprep.subr.mxu0 0.0
        %534 = vmatpush1.msra.mxu0 0.0
        %535 = vmatprep.subr.mxu0 0.0
        %536 = vmatpush1.msra.mxu0 0.0
        %537 = vmatprep.subr.mxu0 0.0
        %538 = vmatpush1.msra.mxu0 0.0
        %539 = vmatprep.subr.mxu0 0.0
        %540 = vmatpush1.msra.mxu0 0.0
        %541 = vmatprep.subr.mxu0 0.0
        %542 = vmatpush1.msra.mxu0 0.0
        %543 = vmatprep.subr.mxu0 0.0
        %544 = vmatpush1.msra.mxu0 0.0
        %545 = vmatprep.subr.mxu0 0.0
        %546 = vmatpush1.msra.mxu0 0.0
        %547 = vmatprep.subr.mxu0 0.0
        %548 = vmatpush1.msra.mxu0 0.0
        %549 = vmatprep.subr.mxu0 0.0
        %550 = vmatpush1.msra.mxu0 0.0
        %551 = vmatprep.subr.mxu0 0.0
        %552 = vmatpush1.msra.mxu0 0.0
        %553 = vmatprep.subr.mxu0 0.0
        %554 = vmatpush1.msra.mxu0 0.0
        %555 = vmatprep.subr.mxu0 0.0
        %556 = vmatpush1.msra.mxu0 0.0
        %557 = vmatprep.subr.mxu0 0.0
        %558 = vmatpush1.msra.mxu0 0.0
        %559 = vmatprep.subr.mxu0 0.0
        %560 = vmatpush1.msra.mxu0 0.0
        %561 = vmatprep.subr.mxu0 0.0
        %562 = vmatpush1.msra.mxu0 0.0
        %563 = vmatprep.subr.mxu0 0.0
        %564 = vmatpush1.msra.mxu0 0.0
        %565 = vmatprep.subr.mxu0 0.0
        %566 = vmatpush1.msra.mxu0 0.0
        %567 = vmatprep.subr.mxu0 0.0
        %568 = vmatpush1.msra.mxu0 0.0
        %569 = vmatprep.subr.mxu0 0.0
        %570 = vmatpush1.msra.mxu0 0.0
        %571 = vmatprep.subr.mxu0 0.0
        %572 = vmatpush1.msra.mxu0 0.0
        %573 = vmatprep.subr.mxu0 0.0
        %574 = vmatpush1.msra.mxu0 0.0
        %575 = vmatprep.subr.mxu0 0.0
        %576 = vmatpush1.msra.mxu0 0.0
        %577 = vmatprep.subr.mxu0 0.0
        %578 = vmatpush1.msra.mxu0 0.0
        %579 = vmatprep.subr.mxu0 0.0
        %580 = vmatpush1.msra.mxu0 0.0
        %581 = vmatprep.subr.mxu0 0.0
        %582 = vmatpush1.msra.mxu0 0.0
        %583 = vmatprep.mubr.f32.mxu0 0.0
        %584 = vmatmul.mubr.f32.gmra.mrb[0].mxu0 %v517
        %v585 = vpop.f32.mrb[0].mxu0
        %v586 = vadd.f32 %v514, %v585
        %v587 = vpop.f32.mrb[0].mxu0
        %588 = vdwg.mxu0
        %vm589 = vcmask 64512
        %v591 = vsel %vm589, %v502, 0
        %v594 = vsel %vm589, %v586, 0
        %596 = vmatprep.subr.mxu0 0.0
        %597 = vmatpush1.xpose.msra.mxu0 %v594
        %598 = vmatprep.subr.mxu0 0.0
        %599 = vmatpush1.xpose.msra.mxu0 0.0
        %600 = vmatprep.subr.mxu0 0.0
        %601 = vmatpush1.xpose.msra.mxu0 0.0
        %602 = vmatprep.subr.mxu0 0.0
        %603 = vmatpush1.xpose.msra.mxu0 0.0
        %604 = vmatprep.subr.mxu0 0.0
        %605 = vmatpush1.xpose.msra.mxu0 0.0
        %606 = vmatprep.subr.mxu0 0.0
        %607 = vmatpush1.xpose.msra.mxu0 0.0
        %608 = vmatprep.subr.mxu0 0.0
        %609 = vmatpush1.xpose.msra.mxu0 0.0
        %610 = vmatprep.subr.mxu0 0.0
        %611 = vmatpush1.xpose.msra.mxu0 0.0
        %612 = vmatprep.subr.mxu0 0.0
        %613 = vmatpush1.xpose.msra.mxu0 0.0
        %614 = vmatprep.subr.mxu0 0.0
        %615 = vmatpush1.xpose.msra.mxu0 0.0
        %616 = vmatprep.subr.mxu0 0.0
        %617 = vmatpush1.xpose.msra.mxu0 0.0
        %618 = vmatprep.subr.mxu0 0.0
        %619 = vmatpush1.xpose.msra.mxu0 0.0
        %620 = vmatprep.subr.mxu0 0.0
        %621 = vmatpush1.xpose.msra.mxu0 0.0
        %622 = vmatprep.subr.mxu0 0.0
        %623 = vmatpush1.xpose.msra.mxu0 0.0
        %624 = vmatprep.subr.mxu0 0.0
        %625 = vmatpush1.xpose.msra.mxu0 0.0
        %626 = vmatprep.subr.mxu0 0.0
        %627 = vmatpush1.xpose.msra.mxu0 0.0
        %628 = vmatprep.subr.mxu0 0.0
        %629 = vmatpush1.xpose.msra.mxu0 0.0
        %630 = vmatprep.subr.mxu0 0.0
        %631 = vmatpush1.xpose.msra.mxu0 0.0
        %632 = vmatprep.subr.mxu0 0.0
        %633 = vmatpush1.xpose.msra.mxu0 0.0
        %634 = vmatprep.subr.mxu0 0.0
        %635 = vmatpush1.xpose.msra.mxu0 0.0
        %636 = vmatprep.subr.mxu0 0.0
        %637 = vmatpush1.xpose.msra.mxu0 0.0
        %638 = vmatprep.subr.mxu0 0.0
        %639 = vmatpush1.xpose.msra.mxu0 0.0
        %640 = vmatprep.subr.mxu0 0.0
        %641 = vmatpush1.xpose.msra.mxu0 0.0
        %642 = vmatprep.subr.mxu0 0.0
        %643 = vmatpush1.xpose.msra.mxu0 0.0
        %644 = vmatprep.subr.mxu0 0.0
        %645 = vmatpush1.xpose.msra.mxu0 0.0
        %646 = vmatprep.subr.mxu0 0.0
        %647 = vmatpush1.xpose.msra.mxu0 0.0
        %648 = vmatprep.subr.mxu0 0.0
        %649 = vmatpush1.xpose.msra.mxu0 0.0
        %650 = vmatprep.subr.mxu0 0.0
        %651 = vmatpush1.xpose.msra.mxu0 0.0
        %652 = vmatprep.subr.mxu0 0.0
        %653 = vmatpush1.xpose.msra.mxu0 0.0
        %654 = vmatprep.subr.mxu0 0.0
        %655 = vmatpush1.xpose.msra.mxu0 0.0
        %656 = vmatprep.subr.mxu0 0.0
        %657 = vmatpush1.xpose.msra.mxu0 0.0
        %658 = vmatprep.subr.mxu0 0.0
        %659 = vmatpush1.xpose.msra.mxu0 0.0
        %660 = vmatprep.mubr.f32.mxu0 0.0
        %661 = vmatmul.mubr.f32.gmra.mrb[0].mxu0 %v591
        %v662 = vpop.f32.mrb[0].mxu0
        %v663 = vadd.f32 0.0, %v662
        %v664 = vpop.f32.mrb[0].mxu0
        %665 = vdwg.mxu0
        %v666 = vmul.f32 %v663, 0.35355338
        %v667 = vsel %vm589, %v666, -inf
        %668 = vmax.xlane.f32.xlu0 %v667
        %v669 = vpop.xlane.xlu0 %668
        %v670 = vsub.f32 %v666, %v669
        %v671 = vmul.f32 %v670, 1.442695
        %v672 = vpow.pop %v671
        %v673 = vsel %vm589, %v672, 0.0
        %674 = vadd.xlane.f32.xlu0 %v673
        %v675 = vpop.xlane.xlu0 %674
        %v676 = vrcp.pop %v675
        %v677 = vmul.f32 %v672, %v676
        %678 = vrot.lane.b32.xlu0 %v586, 96
        %v679 = vpop.permute.xlu0 %678
        %v682 = vsel %vm589, %v677, 0
        %684 = vmatprep.subr.mxu0 0.0
        %685 = vmatpush1.msra.mxu0 %v679
        %686 = vmatprep.subr.mxu0 0.0
        %687 = vmatpush1.msra.mxu0 0.0
        %688 = vmatprep.subr.mxu0 0.0
        %689 = vmatpush1.msra.mxu0 0.0
        %690 = vmatprep.subr.mxu0 0.0
        %691 = vmatpush1.msra.mxu0 0.0
        %692 = vmatprep.subr.mxu0 0.0
        %693 = vmatpush1.msra.mxu0 0.0
        %694 = vmatprep.subr.mxu0 0.0
        %695 = vmatpush1.msra.mxu0 0.0
        %696 = vmatprep.subr.mxu0 0.0
        %697 = vmatpush1.msra.mxu0 0.0
        %698 = vmatprep.subr.mxu0 0.0
        %699 = vmatpush1.msra.mxu0 0.0
        %700 = vmatprep.subr.mxu0 0.0
        %701 = vmatpush1.msra.mxu0 0.0
        %702 = vmatprep.subr.mxu0 0.0
        %703 = vmatpush1.msra.mxu0 0.0
        %704 = vmatprep.subr.mxu0 0.0
        %705 = vmatpush1.msra.mxu0 0.0
        %706 = vmatprep.subr.mxu0 0.0
        %707 = vmatpush1.msra.mxu0 0.0
        %708 = vmatprep.subr.mxu0 0.0
        %709 = vmatpush1.msra.mxu0 0.0
        %710 = vmatprep.subr.mxu0 0.0
        %711 = vmatpush1.msra.mxu0 0.0
        %712 = vmatprep.subr.mxu0 0.0
        %713 = vmatpush1.msra.mxu0 0.0
        %714 = vmatprep.subr.mxu0 0.0
        %715 = vmatpush1.msra.mxu0 0.0
        %716 = vmatprep.subr.mxu0 0.0
        %717 = vmatpush1.msra.mxu0 0.0
        %718 = vmatprep.subr.mxu0 0.0
        %719 = vmatpush1.msra.mxu0 0.0
        %720 = vmatprep.subr.mxu0 0.0
        %721 = vmatpush1.msra.mxu0 0.0
        %722 = vmatprep.subr.mxu0 0.0
        %723 = vmatpush1.msra.mxu0 0.0
        %724 = vmatprep.subr.mxu0 0.0
        %725 = vmatpush1.msra.mxu0 0.0
        %726 = vmatprep.subr.mxu0 0.0
        %727 = vmatpush1.msra.mxu0 0.0
        %728 = vmatprep.subr.mxu0 0.0
        %729 = vmatpush1.msra.mxu0 0.0
        %730 = vmatprep.subr.mxu0 0.0
        %731 = vmatpush1.msra.mxu0 0.0
        %732 = vmatprep.subr.mxu0 0.0
        %733 = vmatpush1.msra.mxu0 0.0
        %734 = vmatprep.subr.mxu0 0.0
        %735 = vmatpush1.msra.mxu0 0.0
        %736 = vmatprep.subr.mxu0 0.0
        %737 = vmatpush1.msra.mxu0 0.0
        %738 = vmatprep.subr.mxu0 0.0
        %739 = vmatpush1.msra.mxu0 0.0
        %740 = vmatprep.subr.mxu0 0.0
        %741 = vmatpush1.msra.mxu0 0.0
        %742 = vmatprep.subr.mxu0 0.0
        %743 = vmatpush1.msra.mxu0 0.0
        %744 = vmatprep.subr.mxu0 0.0
        %745 = vmatpush1.msra.mxu0 0.0
        %746 = vmatprep.subr.mxu0 0.0
        %747 = vmatpush1.msra.mxu0 0.0
        %748 = vmatprep.mubr.f32.mxu0 0.0
        %749 = vmatmul.mubr.f32.gmra.mrb[0].mxu0 %v682
        %v750 = vpop.f32.mrb[0].mxu0
        %v751 = vadd.f32 0.0, %v750
        %v752 = vpop.f32.mrb[0].mxu0
        %753 = vdwg.mxu0
        %754 = vst.msk [vmem:[#allocation2] sm:$0xff] %vm589, %v751
        %755 = vrot.lane.b32.xlu0 %v502, 120
        %v756 = vpop.permute.xlu0 %755
        %757 = vrot.lane.b32.xlu0 %v586, 120
        %v758 = vpop.permute.xlu0 %757
        %v759 = vsel %vm589, %v756, 0
        %v761 = vsel %vm589, %v758, 0
        %763 = vmatprep.subr.mxu0 0.0
        %764 = vmatpush1.xpose.msra.mxu0 %v761
        %765 = vmatprep.subr.mxu0 0.0
        %766 = vmatpush1.xpose.msra.mxu0 0.0
        %767 = vmatprep.subr.mxu0 0.0
        %768 = vmatpush1.xpose.msra.mxu0 0.0
        %769 = vmatprep.subr.mxu0 0.0
        %770 = vmatpush1.xpose.msra.mxu0 0.0
        %771 = vmatprep.subr.mxu0 0.0
        %772 = vmatpush1.xpose.msra.mxu0 0.0
        %773 = vmatprep.subr.mxu0 0.0
        %774 = vmatpush1.xpose.msra.mxu0 0.0
        %775 = vmatprep.subr.mxu0 0.0
        %776 = vmatpush1.xpose.msra.mxu0 0.0
        %777 = vmatprep.subr.mxu0 0.0
        %778 = vmatpush1.xpose.msra.mxu0 0.0
        %779 = vmatprep.subr.mxu0 0.0
        %780 = vmatpush1.xpose.msra.mxu0 0.0
        %781 = vmatprep.subr.mxu0 0.0
        %782 = vmatpush1.xpose.msra.mxu0 0.0
        %783 = vmatprep.subr.mxu0 0.0
        %784 = vmatpush1.xpose.msra.mxu0 0.0
        %785 = vmatprep.subr.mxu0 0.0
        %786 = vmatpush1.xpose.msra.mxu0 0.0
        %787 = vmatprep.subr.mxu0 0.0
        %788 = vmatpush1.xpose.msra.mxu0 0.0
        %789 = vmatprep.subr.mxu0 0.0
        %790 = vmatpush1.xpose.msra.mxu0 0.0
        %791 = vmatprep.subr.mxu0 0.0
        %792 = vmatpush1.xpose.msra.mxu0 0.0
        %793 = vmatprep.subr.mxu0 0.0
        %794 = vmatpush1.xpose.msra.mxu0 0.0
        %795 = vmatprep.subr.mxu0 0.0
        %796 = vmatpush1.xpose.msra.mxu0 0.0
        %797 = vmatprep.subr.mxu0 0.0
        %798 = vmatpush1.xpose.msra.mxu0 0.0
        %799 = vmatprep.subr.mxu0 0.0
        %800 = vmatpush1.xpose.msra.mxu0 0.0
        %801 = vmatprep.subr.mxu0 0.0
        %802 = vmatpush1.xpose.msra.mxu0 0.0
        %803 = vmatprep.subr.mxu0 0.0
        %804 = vmatpush1.xpose.msra.mxu0 0.0
        %805 = vmatprep.subr.mxu0 0.0
        %806 = vmatpush1.xpose.msra.mxu0 0.0
        %807 = vmatprep.subr.mxu0 0.0
        %808 = vmatpush1.xpose.msra.mxu0 0.0
        %809 = vmatprep.subr.mxu0 0.0
        %810 = vmatpush1.xpose.msra.mxu0 0.0
        %811 = vmatprep.subr.mxu0 0.0
        %812 = vmatpush1.xpose.msra.mxu0 0.0
        %813 = vmatprep.subr.mxu0 0.0
        %814 = vmatpush1.xpose.msra.mxu0 0.0
        %815 = vmatprep.subr.mxu0 0.0
        %816 = vmatpush1.xpose.msra.mxu0 0.0
        %817 = vmatprep.subr.mxu0 0.0
        %818 = vmatpush1.xpose.msra.mxu0 0.0
        %819 = vmatprep.subr.mxu0 0.0
        %820 = vmatpush1.xpose.msra.mxu0 0.0
        %821 = vmatprep.subr.mxu0 0.0
        %822 = vmatpush1.xpose.msra.mxu0 0.0
        %823 = vmatprep.subr.mxu0 0.0
        %824 = vmatpush1.xpose.msra.mxu0 0.0
        %825 = vmatprep.subr.mxu0 0.0
        %826 = vmatpush1.xpose.msra.mxu0 0.0
        %827 = vmatprep.mubr.f32.mxu0 0.0
        %828 = vmatmul.mubr.f32.gmra.mrb[0].mxu0 %v759
        %v829 = vpop.f32.mrb[0].mxu0
        %v830 = vadd.f32 0.0, %v829
        %v831 = vpop.f32.mrb[0].mxu0
        %832 = vdwg.mxu0
        %v833 = vmul.f32 %v830, 0.35355338
        %v834 = vsel %vm589, %v833, -inf
        %835 = vmax.xlane.f32.xlu0 %v834
        %v836 = vpop.xlane.xlu0 %835
        %v837 = vsub.f32 %v833, %v836
        %v838 = vmul.f32 %v837, 1.442695
        %v839 = vpow.pop %v838
        %v840 = vsel %vm589, %v839, 0.0
        %841 = vadd.xlane.f32.xlu0 %v840
        %v842 = vpop.xlane.xlu0 %841
        %v843 = vrcp.pop %v842
        %v844 = vmul.f32 %v839, %v843
        %845 = vrot.lane.b32.xlu0 %v586, 88
        %v846 = vpop.permute.xlu0 %845
        %v849 = vsel %vm589, %v844, 0
        %851 = vmatprep.subr.mxu0 0.0
        %852 = vmatpush1.msra.mxu0 %v846
        %853 = vmatprep.subr.mxu0 0.0
        %854 = vmatpush1.msra.mxu0 0.0
        %855 = vmatprep.subr.mxu0 0.0
        %856 = vmatpush1.msra.mxu0 0.0
        %857 = vmatprep.subr.mxu0 0.0
        %858 = vmatpush1.msra.mxu0 0.0
        %859 = vmatprep.subr.mxu0 0.0
        %860 = vmatpush1.msra.mxu0 0.0
        %861 = vmatprep.subr.mxu0 0.0
        %862 = vmatpush1.msra.mxu0 0.0
        %863 = vmatprep.subr.mxu0 0.0
        %864 = vmatpush1.msra.mxu0 0.0
        %865 = vmatprep.subr.mxu0 0.0
        %866 = vmatpush1.msra.mxu0 0.0
        %867 = vmatprep.subr.mxu0 0.0
        %868 = vmatpush1.msra.mxu0 0.0
        %869 = vmatprep.subr.mxu0 0.0
        %870 = vmatpush1.msra.mxu0 0.0
        %871 = vmatprep.subr.mxu0 0.0
        %872 = vmatpush1.msra.mxu0 0.0
        %873 = vmatprep.subr.mxu0 0.0
        %874 = vmatpush1.msra.mxu0 0.0
        %875 = vmatprep.subr.mxu0 0.0
        %876 = vmatpush1.msra.mxu0 0.0
        %877 = vmatprep.subr.mxu0 0.0
        %878 = vmatpush1.msra.mxu0 0.0
        %879 = vmatprep.subr.mxu0 0.0
        %880 = vmatpush1.msra.mxu0 0.0
        %881 = vmatprep.subr.mxu0 0.0
        %882 = vmatpush1.msra.mxu0 0.0
        %883 = vmatprep.subr.mxu0 0.0
        %884 = vmatpush1.msra.mxu0 0.0
        %885 = vmatprep.subr.mxu0 0.0
        %886 = vmatpush1.msra.mxu0 0.0
        %887 = vmatprep.subr.mxu0 0.0
        %888 = vmatpush1.msra.mxu0 0.0
        %889 = vmatprep.subr.mxu0 0.0
        %890 = vmatpush1.msra.mxu0 0.0
        %891 = vmatprep.subr.mxu0 0.0
        %892 = vmatpush1.msra.mxu0 0.0
        %893 = vmatprep.subr.mxu0 0.0
        %894 = vmatpush1.msra.mxu0 0.0
        %895 = vmatprep.subr.mxu0 0.0
        %896 = vmatpush1.msra.mxu0 0.0
        %897 = vmatprep.subr.mxu0 0.0
        %898 = vmatpush1.msra.mxu0 0.0
        %899 = vmatprep.subr.mxu0 0.0
        %900 = vmatpush1.msra.mxu0 0.0
        %901 = vmatprep.subr.mxu0 0.0
        %902 = vmatpush1.msra.mxu0 0.0
        %903 = vmatprep.subr.mxu0 0.0
        %904 = vmatpush1.msra.mxu0 0.0
        %905 = vmatprep.subr.mxu0 0.0
        %906 = vmatpush1.msra.mxu0 0.0
        %907 = vmatprep.subr.mxu0 0.0
        %908 = vmatpush1.msra.mxu0 0.0
        %909 = vmatprep.subr.mxu0 0.0
        %910 = vmatpush1.msra.mxu0 0.0
        %911 = vmatprep.subr.mxu0 0.0
        %912 = vmatpush1.msra.mxu0 0.0
        %913 = vmatprep.subr.mxu0 0.0
        %914 = vmatpush1.msra.mxu0 0.0
        %915 = vmatprep.mubr.f32.mxu0 0.0
        %916 = vmatmul.mubr.f32.gmra.mrb[0].mxu0 %v849
        %v917 = vpop.f32.mrb[0].mxu0
        %v918 = vadd.f32 0.0, %v917
        %v919 = vpop.f32.mrb[0].mxu0
        %920 = vdwg.mxu0
        %922 = vrot.lane.b32.xlu0 %v918, 8
        %v923 = vpop.permute.xlu0 %922
        %vm925 = vcmask 130112
        %926 = vst.msk [vmem:[#allocation2] sm:$0xff] %vm925, %v923
        %927 = vrot.lane.b32.xlu0 %v502, 112
        %v928 = vpop.permute.xlu0 %927
        %929 = vrot.lane.b32.xlu0 %v586, 112
        %v930 = vpop.permute.xlu0 %929
        %v931 = vsel %vm589, %v928, 0
        %v933 = vsel %vm589, %v930, 0
        %935 = vmatprep.subr.mxu0 0.0
        %936 = vmatpush1.xpose.msra.mxu0 %v933
        %937 = vmatprep.subr.mxu0 0.0
        %938 = vmatpush1.xpose.msra.mxu0 0.0
        %939 = vmatprep.subr.mxu0 0.0
        %940 = vmatpush1.xpose.msra.mxu0 0.0
        %941 = vmatprep.subr.mxu0 0.0
        %942 = vmatpush1.xpose.msra.mxu0 0.0
        %943 = vmatprep.subr.mxu0 0.0
        %944 = vmatpush1.xpose.msra.mxu0 0.0
        %945 = vmatprep.subr.mxu0 0.0
        %946 = vmatpush1.xpose.msra.mxu0 0.0
        %947 = vmatprep.subr.mxu0 0.0
        %948 = vmatpush1.xpose.msra.mxu0 0.0
        %949 = vmatprep.subr.mxu0 0.0
        %950 = vmatpush1.xpose.msra.mxu0 0.0
        %951 = vmatprep.subr.mxu0 0.0
        %952 = vmatpush1.xpose.msra.mxu0 0.0
        %953 = vmatprep.subr.mxu0 0.0
        %954 = vmatpush1.xpose.msra.mxu0 0.0
        %955 = vmatprep.subr.mxu0 0.0
        %956 = vmatpush1.xpose.msra.mxu0 0.0
        %957 = vmatprep.subr.mxu0 0.0
        %958 = vmatpush1.xpose.msra.mxu0 0.0
        %959 = vmatprep.subr.mxu0 0.0
        %960 = vmatpush1.xpose.msra.mxu0 0.0
        %961 = vmatprep.subr.mxu0 0.0
        %962 = vmatpush1.xpose.msra.mxu0 0.0
        %963 = vmatprep.subr.mxu0 0.0
        %964 = vmatpush1.xpose.msra.mxu0 0.0
        %965 = vmatprep.subr.mxu0 0.0
        %966 = vmatpush1.xpose.msra.mxu0 0.0
        %967 = vmatprep.subr.mxu0 0.0
        %968 = vmatpush1.xpose.msra.mxu0 0.0
        %969 = vmatprep.subr.mxu0 0.0
        %970 = vmatpush1.xpose.msra.mxu0 0.0
        %971 = vmatprep.subr.mxu0 0.0
        %972 = vmatpush1.xpose.msra.mxu0 0.0
        %973 = vmatprep.subr.mxu0 0.0
        %974 = vmatpush1.xpose.msra.mxu0 0.0
        %975 = vmatprep.subr.mxu0 0.0
        %976 = vmatpush1.xpose.msra.mxu0 0.0
        %977 = vmatprep.subr.mxu0 0.0
        %978 = vmatpush1.xpose.msra.mxu0 0.0
        %979 = vmatprep.subr.mxu0 0.0
        %980 = vmatpush1.xpose.msra.mxu0 0.0
        %981 = vmatprep.subr.mxu0 0.0
        %982 = vmatpush1.xpose.msra.mxu0 0.0
        %983 = vmatprep.subr.mxu0 0.0
        %984 = vmatpush1.xpose.msra.mxu0 0.0
        %985 = vmatprep.subr.mxu0 0.0
        %986 = vmatpush1.xpose.msra.mxu0 0.0
        %987 = vmatprep.subr.mxu0 0.0
        %988 = vmatpush1.xpose.msra.mxu0 0.0
        %989 = vmatprep.subr.mxu0 0.0
        %990 = vmatpush1.xpose.msra.mxu0 0.0
        %991 = vmatprep.subr.mxu0 0.0
        %992 = vmatpush1.xpose.msra.mxu0 0.0
        %993 = vmatprep.subr.mxu0 0.0
        %994 = vmatpush1.xpose.msra.mxu0 0.0
        %995 = vmatprep.subr.mxu0 0.0
        %996 = vmatpush1.xpose.msra.mxu0 0.0
        %997 = vmatprep.subr.mxu0 0.0
        %998 = vmatpush1.xpose.msra.mxu0 0.0
        %999 = vmatprep.mubr.f32.mxu0 0.0
        %1000 = vmatmul.mubr.f32.gmra.mrb[0].mxu0 %v931
        %v1001 = vpop.f32.mrb[0].mxu0
        %v1002 = vadd.f32 0.0, %v1001
        %v1003 = vpop.f32.mrb[0].mxu0
        %1004 = vdwg.mxu0
        %v1005 = vmul.f32 %v1002, 0.35355338
        %v1006 = vsel %vm589, %v1005, -inf
        %1007 = vmax.xlane.f32.xlu0 %v1006
        %v1008 = vpop.xlane.xlu0 %1007
        %v1009 = vsub.f32 %v1005, %v1008
        %v1010 = vmul.f32 %v1009, 1.442695
        %v1011 = vpow.pop %v1010
        %v1012 = vsel %vm589, %v1011, 0.0
        %1013 = vadd.xlane.f32.xlu0 %v1012
        %v1014 = vpop.xlane.xlu0 %1013
        %v1015 = vrcp.pop %v1014
        %v1016 = vmul.f32 %v1011, %v1015
        %1017 = vrot.lane.b32.xlu0 %v586, 80
        %v1018 = vpop.permute.xlu0 %1017
        %v1021 = vsel %vm589, %v1016, 0
        %1023 = vmatprep.subr.mxu0 0.0
        %1024 = vmatpush1.msra.mxu0 %v1018
        %1025 = vmatprep.subr.mxu0 0.0
        %1026 = vmatpush1.msra.mxu0 0.0
        %1027 = vmatprep.subr.mxu0 0.0
        %1028 = vmatpush1.msra.mxu0 0.0
        %1029 = vmatprep.subr.mxu0 0.0
        %1030 = vmatpush1.msra.mxu0 0.0
        %1031 = vmatprep.subr.mxu0 0.0
        %1032 = vmatpush1.msra.mxu0 0.0
        %1033 = vmatprep.subr.mxu0 0.0
        %1034 = vmatpush1.msra.mxu0 0.0
        %1035 = vmatprep.subr.mxu0 0.0
        %1036 = vmatpush1.msra.mxu0 0.0
        %1037 = vmatprep.subr.mxu0 0.0
        %1038 = vmatpush1.msra.mxu0 0.0
        %1039 = vmatprep.subr.mxu0 0.0
        %1040 = vmatpush1.msra.mxu0 0.0
        %1041 = vmatprep.subr.mxu0 0.0
        %1042 = vmatpush1.msra.mxu0 0.0
        %1043 = vmatprep.subr.mxu0 0.0
        %1044 = vmatpush1.msra.mxu0 0.0
        %1045 = vmatprep.subr.mxu0 0.0
        %1046 = vmatpush1.msra.mxu0 0.0
        %1047 = vmatprep.subr.mxu0 0.0
        %1048 = vmatpush1.msra.mxu0 0.0
        %1049 = vmatprep.subr.mxu0 0.0
        %1050 = vmatpush1.msra.mxu0 0.0
        %1051 = vmatprep.subr.mxu0 0.0
        %1052 = vmatpush1.msra.mxu0 0.0
        %1053 = vmatprep.subr.mxu0 0.0
        %1054 = vmatpush1.msra.mxu0 0.0
        %1055 = vmatprep.subr.mxu0 0.0
        %1056 = vmatpush1.msra.mxu0 0.0
        %1057 = vmatprep.subr.mxu0 0.0
        %1058 = vmatpush1.msra.mxu0 0.0
        %1059 = vmatprep.subr.mxu0 0.0
        %1060 = vmatpush1.msra.mxu0 0.0
        %1061 = vmatprep.subr.mxu0 0.0
        %1062 = vmatpush1.msra.mxu0 0.0
        %1063 = vmatprep.subr.mxu0 0.0
        %1064 = vmatpush1.msra.mxu0 0.0
        %1065 = vmatprep.subr.mxu0 0.0
        %1066 = vmatpush1.msra.mxu0 0.0
        %1067 = vmatprep.subr.mxu0 0.0
        %1068 = vmatpush1.msra.mxu0 0.0
        %1069 = vmatprep.subr.mxu0 0.0
        %1070 = vmatpush1.msra.mxu0 0.0
        %1071 = vmatprep.subr.mxu0 0.0
        %1072 = vmatpush1.msra.mxu0 0.0
        %1073 = vmatprep.subr.mxu0 0.0
        %1074 = vmatpush1.msra.mxu0 0.0
        %1075 = vmatprep.subr.mxu0 0.0
        %1076 = vmatpush1.msra.mxu0 0.0
        %1077 = vmatprep.subr.mxu0 0.0
        %1078 = vmatpush1.msra.mxu0 0.0
        %1079 = vmatprep.subr.mxu0 0.0
        %1080 = vmatpush1.msra.mxu0 0.0
        %1081 = vmatprep.subr.mxu0 0.0
        %1082 = vmatpush1.msra.mxu0 0.0
        %1083 = vmatprep.subr.mxu0 0.0
        %1084 = vmatpush1.msra.mxu0 0.0
        %1085 = vmatprep.subr.mxu0 0.0
        %1086 = vmatpush1.msra.mxu0 0.0
        %1087 = vmatprep.mubr.f32.mxu0 0.0
        %1088 = vmatmul.mubr.f32.gmra.mrb[0].mxu0 %v1021
        %v1089 = vpop.f32.mrb[0].mxu0
        %v1090 = vadd.f32 0.0, %v1089
        %v1091 = vpop.f32.mrb[0].mxu0
        %1092 = vdwg.mxu0
        %1094 = vrot.lane.b32.xlu0 %v1090, 16
        %v1095 = vpop.permute.xlu0 %1094
        %vm1097 = vcmask 195712
        %1098 = vst.msk [vmem:[#allocation2] sm:$0xff] %vm1097, %v1095
        %1099 = vrot.lane.b32.xlu0 %v502, 104
        %v1100 = vpop.permute.xlu0 %1099
        %1101 = vrot.lane.b32.xlu0 %v586, 104
        %v1102 = vpop.permute.xlu0 %1101
        %v1103 = vsel %vm589, %v1100, 0
        %v1105 = vsel %vm589, %v1102, 0
        %1107 = vmatprep.subr.mxu0 0.0
        %1108 = vmatpush1.xpose.msra.mxu0 %v1105
        %1109 = vmatprep.subr.mxu0 0.0
        %1110 = vmatpush1.xpose.msra.mxu0 0.0
        %1111 = vmatprep.subr.mxu0 0.0
        %1112 = vmatpush1.xpose.msra.mxu0 0.0
        %1113 = vmatprep.subr.mxu0 0.0
        %1114 = vmatpush1.xpose.msra.mxu0 0.0
        %1115 = vmatprep.subr.mxu0 0.0
        %1116 = vmatpush1.xpose.msra.mxu0 0.0
        %1117 = vmatprep.subr.mxu0 0.0
        %1118 = vmatpush1.xpose.msra.mxu0 0.0
        %1119 = vmatprep.subr.mxu0 0.0
        %1120 = vmatpush1.xpose.msra.mxu0 0.0
        %1121 = vmatprep.subr.mxu0 0.0
        %1122 = vmatpush1.xpose.msra.mxu0 0.0
        %1123 = vmatprep.subr.mxu0 0.0
        %1124 = vmatpush1.xpose.msra.mxu0 0.0
        %1125 = vmatprep.subr.mxu0 0.0
        %1126 = vmatpush1.xpose.msra.mxu0 0.0
        %1127 = vmatprep.subr.mxu0 0.0
        %1128 = vmatpush1.xpose.msra.mxu0 0.0
        %1129 = vmatprep.subr.mxu0 0.0
        %1130 = vmatpush1.xpose.msra.mxu0 0.0
        %1131 = vmatprep.subr.mxu0 0.0
        %1132 = vmatpush1.xpose.msra.mxu0 0.0
        %1133 = vmatprep.subr.mxu0 0.0
        %1134 = vmatpush1.xpose.msra.mxu0 0.0
        %1135 = vmatprep.subr.mxu0 0.0
        %1136 = vmatpush1.xpose.msra.mxu0 0.0
        %1137 = vmatprep.subr.mxu0 0.0
        %1138 = vmatpush1.xpose.msra.mxu0 0.0
        %1139 = vmatprep.subr.mxu0 0.0
        %1140 = vmatpush1.xpose.msra.mxu0 0.0
        %1141 = vmatprep.subr.mxu0 0.0
        %1142 = vmatpush1.xpose.msra.mxu0 0.0
        %1143 = vmatprep.subr.mxu0 0.0
        %1144 = vmatpush1.xpose.msra.mxu0 0.0
        %1145 = vmatprep.subr.mxu0 0.0
        %1146 = vmatpush1.xpose.msra.mxu0 0.0
        %1147 = vmatprep.subr.mxu0 0.0
        %1148 = vmatpush1.xpose.msra.mxu0 0.0
        %1149 = vmatprep.subr.mxu0 0.0
        %1150 = vmatpush1.xpose.msra.mxu0 0.0
        %1151 = vmatprep.subr.mxu0 0.0
        %1152 = vmatpush1.xpose.msra.mxu0 0.0
        %1153 = vmatprep.subr.mxu0 0.0
        %1154 = vmatpush1.xpose.msra.mxu0 0.0
        %1155 = vmatprep.subr.mxu0 0.0
        %1156 = vmatpush1.xpose.msra.mxu0 0.0
        %1157 = vmatprep.subr.mxu0 0.0
        %1158 = vmatpush1.xpose.msra.mxu0 0.0
        %1159 = vmatprep.subr.mxu0 0.0
        %1160 = vmatpush1.xpose.msra.mxu0 0.0
        %1161 = vmatprep.subr.mxu0 0.0
        %1162 = vmatpush1.xpose.msra.mxu0 0.0
        %1163 = vmatprep.subr.mxu0 0.0
        %1164 = vmatpush1.xpose.msra.mxu0 0.0
        %1165 = vmatprep.subr.mxu0 0.0
        %1166 = vmatpush1.xpose.msra.mxu0 0.0
        %1167 = vmatprep.subr.mxu0 0.0
        %1168 = vmatpush1.xpose.msra.mxu0 0.0
        %1169 = vmatprep.subr.mxu0 0.0
        %1170 = vmatpush1.xpose.msra.mxu0 0.0
        %1171 = vmatprep.mubr.f32.mxu0 0.0
        %1172 = vmatmul.mubr.f32.gmra.mrb[0].mxu0 %v1103
        %v1173 = vpop.f32.mrb[0].mxu0
        %v1174 = vadd.f32 0.0, %v1173
        %v1175 = vpop.f32.mrb[0].mxu0
        %1176 = vdwg.mxu0
        %v1177 = vmul.f32 %v1174, 0.35355338
        %v1178 = vsel %vm589, %v1177, -inf
        %1179 = vmax.xlane.f32.xlu0 %v1178
        %v1180 = vpop.xlane.xlu0 %1179
        %v1181 = vsub.f32 %v1177, %v1180
        %v1182 = vmul.f32 %v1181, 1.442695
        %v1183 = vpow.pop %v1182
        %v1184 = vsel %vm589, %v1183, 0.0
        %1185 = vadd.xlane.f32.xlu0 %v1184
        %v1186 = vpop.xlane.xlu0 %1185
        %v1187 = vrcp.pop %v1186
        %v1188 = vmul.f32 %v1183, %v1187
        %1189 = vrot.lane.b32.xlu0 %v586, 72
        %v1190 = vpop.permute.xlu0 %1189
        %v1193 = vsel %vm589, %v1188, 0
        %1195 = vmatprep.subr.mxu0 0.0
        %1196 = vmatpush1.msra.mxu0 %v1190
        %1197 = vmatprep.subr.mxu0 0.0
        %1198 = vmatpush1.msra.mxu0 0.0
        %1199 = vmatprep.subr.mxu0 0.0
        %1200 = vmatpush1.msra.mxu0 0.0
        %1201 = vmatprep.subr.mxu0 0.0
        %1202 = vmatpush1.msra.mxu0 0.0
        %1203 = vmatprep.subr.mxu0 0.0
        %1204 = vmatpush1.msra.mxu0 0.0
        %1205 = vmatprep.subr.mxu0 0.0
        %1206 = vmatpush1.msra.mxu0 0.0
        %1207 = vmatprep.subr.mxu0 0.0
        %1208 = vmatpush1.msra.mxu0 0.0
        %1209 = vmatprep.subr.mxu0 0.0
        %1210 = vmatpush1.msra.mxu0 0.0
        %1211 = vmatprep.subr.mxu0 0.0
        %1212 = vmatpush1.msra.mxu0 0.0
        %1213 = vmatprep.subr.mxu0 0.0
        %1214 = vmatpush1.msra.mxu0 0.0
        %1215 = vmatprep.subr.mxu0 0.0
        %1216 = vmatpush1.msra.mxu0 0.0
        %1217 = vmatprep.subr.mxu0 0.0
        %1218 = vmatpush1.msra.mxu0 0.0
        %1219 = vmatprep.subr.mxu0 0.0
        %1220 = vmatpush1.msra.mxu0 0.0
        %1221 = vmatprep.subr.mxu0 0.0
        %1222 = vmatpush1.msra.mxu0 0.0
        %1223 = vmatprep.subr.mxu0 0.0
        %1224 = vmatpush1.msra.mxu0 0.0
        %1225 = vmatprep.subr.mxu0 0.0
        %1226 = vmatpush1.msra.mxu0 0.0
        %1227 = vmatprep.subr.mxu0 0.0
        %1228 = vmatpush1.msra.mxu0 0.0
        %1229 = vmatprep.subr.mxu0 0.0
        %1230 = vmatpush1.msra.mxu0 0.0
        %1231 = vmatprep.subr.mxu0 0.0
        %1232 = vmatpush1.msra.mxu0 0.0
        %1233 = vmatprep.subr.mxu0 0.0
        %1234 = vmatpush1.msra.mxu0 0.0
        %1235 = vmatprep.subr.mxu0 0.0
        %1236 = vmatpush1.msra.mxu0 0.0
        %1237 = vmatprep.subr.mxu0 0.0
        %1238 = vmatpush1.msra.mxu0 0.0
        %1239 = vmatprep.subr.mxu0 0.0
        %1240 = vmatpush1.msra.mxu0 0.0
        %1241 = vmatprep.subr.mxu0 0.0
        %1242 = vmatpush1.msra.mxu0 0.0
        %1243 = vmatprep.subr.mxu0 0.0
        %1244 = vmatpush1.msra.mxu0 0.0
        %1245 = vmatprep.subr.mxu0 0.0
        %1246 = vmatpush1.msra.mxu0 0.0
        %1247 = vmatprep.subr.mxu0 0.0
        %1248 = vmatpush1.msra.mxu0 0.0
        %1249 = vmatprep.subr.mxu0 0.0
        %1250 = vmatpush1.msra.mxu0 0.0
        %1251 = vmatprep.subr.mxu0 0.0
        %1252 = vmatpush1.msra.mxu0 0.0
        %1253 = vmatprep.subr.mxu0 0.0
        %1254 = vmatpush1.msra.mxu0 0.0
        %1255 = vmatprep.subr.mxu0 0.0
        %1256 = vmatpush1.msra.mxu0 0.0
        %1257 = vmatprep.subr.mxu0 0.0
        %1258 = vmatpush1.msra.mxu0 0.0
        %1259 = vmatprep.mubr.f32.mxu0 0.0
        %1260 = vmatmul.mubr.f32.gmra.mrb[0].mxu0 %v1193
        %v1261 = vpop.f32.mrb[0].mxu0
        %v1262 = vadd.f32 0.0, %v1261
        %v1263 = vpop.f32.mrb[0].mxu0
        %1264 = vdwg.mxu0
        %1266 = vrot.lane.b32.xlu0 %v1262, 24
        %v1267 = vpop.permute.xlu0 %1266
        %vm1269 = vcmask 261312
        %1270 = vst.msk [vmem:[#allocation2] sm:$0xff] %vm1269, %v1267
        %v1271 = vld [vmem:[#allocation2] sm:$0xff]
        %v1272 = vld [vmem:[#allocation11] sm:$0xff]
        %v1273 = vld [vmem:[#allocation11 + $0x8] sm:$0xff]
        %v1274 = vld [vmem:[#allocation11 + $0x10] sm:$0xff]
        %v1275 = vld [vmem:[#allocation11 + $0x18] sm:$0xff]
        %v1276 = vld [vmem:[%s7] sm:$0x1]
        %v1278 = vlaneseq
        %v1279 = vshrl.u32 %v1278, 7
        %v1280 = vsub.s32 0, %v1279
        %v1281 = vrot.slane %v1276, %v1280
        %v1284 = vsel %vm431, %v1271, 0
        %1286 = vmatprep.subr.mxu0 0.0
        %1287 = vmatpush1.msra.mxu0 %v1272
        %1288 = vmatprep.subr.mxu0 0.0
        %1289 = vmatpush1.msra.mxu0 %v1273
        %1290 = vmatprep.subr.mxu0 0.0
        %1291 = vmatpush1.msra.mxu0 %v1274
        %1292 = vmatprep.subr.mxu0 0.0
        %1293 = vmatpush1.msra.mxu0 %v1275
        %1294 = vmatprep.subr.mxu0 0.0
        %1295 = vmatpush1.msra.mxu0 0.0
        %1296 = vmatprep.subr.mxu0 0.0
        %1297 = vmatpush1.msra.mxu0 0.0
        %1298 = vmatprep.subr.mxu0 0.0
        %1299 = vmatpush1.msra.mxu0 0.0
        %1300 = vmatprep.subr.mxu0 0.0
        %1301 = vmatpush1.msra.mxu0 0.0
        %1302 = vmatprep.subr.mxu0 0.0
        %1303 = vmatpush1.msra.mxu0 0.0
        %1304 = vmatprep.subr.mxu0 0.0
        %1305 = vmatpush1.msra.mxu0 0.0
        %1306 = vmatprep.subr.mxu0 0.0
        %1307 = vmatpush1.msra.mxu0 0.0
        %1308 = vmatprep.subr.mxu0 0.0
        %1309 = vmatpush1.msra.mxu0 0.0
        %1310 = vmatprep.subr.mxu0 0.0
        %1311 = vmatpush1.msra.mxu0 0.0
        %1312 = vmatprep.subr.mxu0 0.0
        %1313 = vmatpush1.msra.mxu0 0.0
        %1314 = vmatprep.subr.mxu0 0.0
        %1315 = vmatpush1.msra.mxu0 0.0
        %1316 = vmatprep.subr.mxu0 0.0
        %1317 = vmatpush1.msra.mxu0 0.0
        %1318 = vmatprep.subr.mxu0 0.0
        %1319 = vmatpush1.msra.mxu0 0.0
        %1320 = vmatprep.subr.mxu0 0.0
        %1321 = vmatpush1.msra.mxu0 0.0
        %1322 = vmatprep.subr.mxu0 0.0
        %1323 = vmatpush1.msra.mxu0 0.0
        %1324 = vmatprep.subr.mxu0 0.0
        %1325 = vmatpush1.msra.mxu0 0.0
        %1326 = vmatprep.subr.mxu0 0.0
        %1327 = vmatpush1.msra.mxu0 0.0
        %1328 = vmatprep.subr.mxu0 0.0
        %1329 = vmatpush1.msra.mxu0 0.0
        %1330 = vmatprep.subr.mxu0 0.0
        %1331 = vmatpush1.msra.mxu0 0.0
        %1332 = vmatprep.subr.mxu0 0.0
        %1333 = vmatpush1.msra.mxu0 0.0
        %1334 = vmatprep.subr.mxu0 0.0
        %1335 = vmatpush1.msra.mxu0 0.0
        %1336 = vmatprep.subr.mxu0 0.0
        %1337 = vmatpush1.msra.mxu0 0.0
        %1338 = vmatprep.subr.mxu0 0.0
        %1339 = vmatpush1.msra.mxu0 0.0
        %1340 = vmatprep.subr.mxu0 0.0
        %1341 = vmatpush1.msra.mxu0 0.0
        %1342 = vmatprep.subr.mxu0 0.0
        %1343 = vmatpush1.msra.mxu0 0.0
        %1344 = vmatprep.subr.mxu0 0.0
        %1345 = vmatpush1.msra.mxu0 0.0
        %1346 = vmatprep.subr.mxu0 0.0
        %1347 = vmatpush1.msra.mxu0 0.0
        %1348 = vmatprep.subr.mxu0 0.0
        %1349 = vmatpush1.msra.mxu0 0.0
        %1350 = vmatprep.mubr.f32.mxu0 0.0
        %1351 = vmatmul.mubr.f32.gmra.mrb[0].mxu0 %v1284
        %v1352 = vpop.f32.mrb[0].mxu0
        %v1353 = vadd.f32 %v1281, %v1352
        %v1354 = vpop.f32.mrb[0].mxu0
        %1355 = vdwg.mxu0
        %1356 = vst.msk [vmem:[%s417] sm:$0xff] %vm431, %v1353
        %s1357 = sand.u32 %s231, 1
        %s1358 = scalar_lea.sflag [#allocation5], %s1357
        %s1359 = sand.u32 %s231, 1
        %s1360 = smul.addr %s1359, 8
        %s1361 = scalar_lea.vmem [#allocation12], %s1360
        // Predicated region
        $region73: #{tpu_custom_call.1} parent=51 // pred_check
          %p1362 = pneg %p241
        $region74: #{tpu_custom_call.1} parent=51 // pred_check_branch
          %1364 = sbr.rel (%p1362) target = $region76
        $region75: #{tpu_custom_call.1} parent=51 // pred_region
          %s1366 = ssub.s32 128, 128
          %1367 = vsyncadd %s1358, %s1366
          %s1368 = sadd.s32 %s34, %s33
          %s1369 = smul.addr %s1368, 128
          %s1370 = scalar_lea.hbm %s8, %s1369
          %s1372 = sshll.u32 %s1361, 4
          %s1373 = int_to_ptr.vmem [resolvable:$true] %s1372
          %1375 = dma.vmem_to_hbm [thread:$0]  %s1373, 128, %s1370, %s1358
        $region76: #{tpu_custom_call.1} parent=51 // pred_fallthru
          _
      $region52: #{tpu_custom_call.1} parent=5 // pred_fallthru
        _
      %p1376 = scmp.le.s32.totalorder 2, %s24
      // Predicated region
      $region77: #{tpu_custom_call.1} parent=5 // pred_check
        %p1377 = pneg %p1376
      $region78: #{tpu_custom_call.1} parent=5 // pred_check_branch
        %1379 = sbr.rel (%p1377) target = $region80
      $region79: #{tpu_custom_call.1} parent=5 // pred_region
        %s1380 = ssub.s32 %s24, 2
        // Predicated region
        $region81: #{tpu_custom_call.1} parent=79 // pred_check
          %p1381 = pneg %p247
        $region82: #{tpu_custom_call.1} parent=79 // pred_check_branch
          %1383 = sbr.rel (%p1381) target = $region84
        $region83: #{tpu_custom_call.1} parent=79 // pred_region
          %s1384 = sand.u32 %s232, 1
          %s1385 = scalar_lea.sflag [#allocation5], %s1384
          %s1386 = sand.u32 %s232, 1
          %s1387 = smul.addr %s1386, 8
          %s1388 = scalar_lea.vmem [#allocation12], %s1387
          %1389 = dma.done %s1385, 128
        $region84: #{tpu_custom_call.1} parent=79 // pred_fallthru
          _
      $region80: #{tpu_custom_call.1} parent=5 // pred_fallthru
        _
    $region6: #{tpu_custom_call.1} parent=1 // loop_footer
      %s28 = sadd.s32 1, %s24
    $region7: #{tpu_custom_call.1} parent=1 // loop_footer_branch
      %23 = sbr.rel target = $region3
    $region8: #{tpu_custom_call.1} parent=1 // loop_exit
      _
    %1390 = vsyncpa [#allocation4], 1
    %s1391 = scalar_lea.sflag [#allocation4], 1
    %1392 = vsyncpa %s1391, 1
    %1393 = vsyncpa [#allocation7], 1
    %s1394 = scalar_lea.sflag [#allocation7], 1
    %1395 = vsyncpa %s1394, 1
    %1396 = vsyncpa [#allocation10], 1
    %1397 = vsyncpa [#allocation5], 1
    %s1398 = scalar_lea.sflag [#allocation5], 1
    %1399 = vsyncpa %s1398, 1

</llo_original>
